<compile_context>
chip_gen: v7x
topology: tpu7x:2x2x1
jax: 0.10.0
libtpu: 0.0.40
codegen_flags: <defaults>
</compile_context>

<pallas_src>
import functools

import jax
import jax.numpy as jnp
from jax import lax
from jax.experimental import pallas as pl
from jax.experimental.pallas import tpu as pltpu


# ---------------------------------------------------------------------------
# Fused Pallas kernel: one image per grid step; everything stays in VMEM.
# ---------------------------------------------------------------------------
def _bottleneck_kernel(H, W, P, TOP, CHUNK,
                       x_ref, w1_ref, b1_ref, w2_ref, b2_ref, w3_ref, b3_ref,
                       o_ref, t1_scr, taps_scr, t2i_scr):
    # Zero the pitch-padded staging scratch: the never-written rows/columns are
    # the conv3x3 zero halo. (Re-done every step for megacore correctness.)
    t1_scr[...] = jnp.zeros_like(t1_scr)

    xf = x_ref[0]                                           # (H*W, cin) bf16

    # ---- conv1x1 + bn1 (scale folded into w1) + relu ----------------------
    t1 = jnp.dot(xf, w1_ref[...], preferred_element_type=jnp.float32)
    t1 = jnp.maximum(t1 + b1_ref[...], 0.0).astype(jnp.bfloat16)   # (H*W, CHUNK)

    # Scatter dense rows into the pitch-P padded layout.  P % 8 == 0, so every
    # destination strip starts on a sublane-tile boundary.
    for h in range(H):
        t1_scr[(TOP + h) * P:(TOP + h) * P + W, :] = t1[h * W:(h + 1) * W, :]

    # ---- im2col: 9 shifted slab copies into a lane-aligned taps buffer -----
    # taps row j (j = h*P + w) holds the 9 halo neighbours of pixel (h, w).
    for t in range(9):
        dy, dx = t // 3 - 1, t % 3 - 1
        off = TOP * P + dy * P + dx
        taps_scr[:, t * CHUNK:(t + 1) * CHUNK] = t1_scr[off:off + H * P, :]

    # ---- conv3x3 (stride=1, pad=1) as ONE K = 9*CHUNK matmul + bn2 + relu ---
    t2 = jnp.dot(taps_scr[...], w2_ref[...], preferred_element_type=jnp.float32)
    t2 = jnp.maximum(t2 + b2_ref[...], 0.0)                 # (H*P, width) f32

    # Gather the interior (real-pixel) rows back to dense order; gap rows are
    # garbage by construction and are simply skipped.
    for h in range(H):
        t2i_scr[h * W:(h + 1) * W, :] = t2[h * P:h * P + W, :].astype(jnp.bfloat16)

    # ---- conv1x1 + bn3 + identity residual + relu ---------------------------
    y3 = jnp.dot(t2i_scr[...], w3_ref[...], preferred_element_type=jnp.float32)
    out = jnp.maximum(y3 + b3_ref[...] + xf.astype(jnp.float32), 0.0)
    o_ref[0] = out.astype(jnp.bfloat16)                     # interior rows only


# ---------------------------------------------------------------------------
# Wrapper: NHWC in, NHWC out.  Single fused pallas_call over the batch.
# ---------------------------------------------------------------------------
@jax.jit
def bottleneck_forward(x_nhwc, prep):
    N, H, W, cin = x_nhwc.shape
    CHUNK = prep["w1"].shape[1]          # width rounded up to a lane multiple
    width = prep["w3"].shape[0]
    cout = prep["w3"].shape[1]
    assert cin == cout, "identity residual needs inplanes == planes * expansion"
    assert prep["w2"].shape[0] == 9 * CHUNK

    # Pitch-padded staging layout: pixel (h, w) lives at row (TOP + h)*P + w.
    P = ((W + 2 + 7) // 8) * 8           # row pitch, 8-aligned, >= W + 2
    TOP = 2                              # leading pad rows (units of P)
    R = (H + 4) * P                      # staging rows (covers the 3x3 halo)
    assert P % 8 == 0 and P >= W + 2
    assert TOP * P - P - 1 >= 0 and (H + 3) * P <= R - 1    # halo reads in bounds
    HW = H * W

    xf = x_nhwc.reshape(N, HW, cin).astype(jnp.bfloat16)

    kernel = functools.partial(_bottleneck_kernel, H, W, P, TOP, CHUNK)

    out = pl.pallas_call(
        kernel,
        out_shape=jax.ShapeDtypeStruct((N, HW, cout), jnp.bfloat16),
        grid=(N,),
        in_specs=[
            pl.BlockSpec((1, HW, cin), lambda n: (n, 0, 0)),          # x (dense)
            pl.BlockSpec((cin, CHUNK), lambda n: (0, 0)),             # w1 * s1
            pl.BlockSpec((1, CHUNK), lambda n: (0, 0)),               # b1
            pl.BlockSpec((9 * CHUNK, width), lambda n: (0, 0)),       # w2 * s2 (flat K)
            pl.BlockSpec((1, width), lambda n: (0, 0)),               # b2
            pl.BlockSpec((width, cout), lambda n: (0, 0)),            # w3 * s3
            pl.BlockSpec((1, cout), lambda n: (0, 0)),                # b3
        ],
        out_specs=pl.BlockSpec((1, HW, cout), lambda n: (n, 0, 0)),
        scratch_shapes=[
            pltpu.VMEM((R, CHUNK), jnp.bfloat16),            # pitch-padded t1
            pltpu.VMEM((H * P, 9 * CHUNK), jnp.bfloat16),    # im2col taps
            pltpu.VMEM((HW, width), jnp.bfloat16),           # interior t2
        ],
        compiler_params=pltpu.CompilerParams(
            dimension_semantics=("parallel",),
            vmem_limit_bytes=48 * 1024 * 1024,
        ),
    )(xf, prep["w1"], prep["b1"], prep["w2"], prep["b2"], prep["w3"], prep["b3"])

    return out.reshape(N, H, W, cout)


# ---------------------------------------------------------------------------
# One-time parameter prep: fold BN scales into weights, pad width -> CHUNK
# (lane alignment for the im2col buffer), flatten w2 to (9*CHUNK, width), bf16.
# ---------------------------------------------------------------------------
def prepare_params(params):
    cin, width = params["w1"].shape
    cout = params["w3"].shape[1]
    chunk = ((width + 127) // 128) * 128
    pad = chunk - width

    w1 = jnp.pad(params["w1"] * params["s1"], ((0, 0), (0, pad))).astype(jnp.bfloat16)
    b1 = jnp.pad(params["b1"], ((0, 0), (0, pad))).astype(jnp.float32)
    w2 = jnp.pad(params["w2"] * params["s2"], ((0, 0), (0, pad), (0, 0)))
    w2 = w2.reshape(9 * chunk, width).astype(jnp.bfloat16)
    w3 = (params["w3"] * params["s3"]).astype(jnp.bfloat16)
    return {"w1": w1, "b1": b1,
            "w2": w2, "b2": params["b2"].astype(jnp.float32),
            "w3": w3, "b3": params["b3"].astype(jnp.float32)}


# ---------------------------------------------------------------------------
# Pure-JAX reference (lax conv) for validation.  BN folding is exact in real
# arithmetic; weights are rounded to bf16 like the kernel operands.
# ---------------------------------------------------------------------------
def bottleneck_ref(x, p):
    q = lambda a: a.astype(jnp.bfloat16).astype(jnp.float32)
    cin = x.shape[-1]
    width = p["w1"].shape[1]
    cout = p["w3"].shape[1]
    dn = ("NHWC", "HWIO", "NHWC")
    xq = q(x)

    w1 = q(p["w1"] * p["s1"]).reshape(1, 1, cin, width)
    w2 = q(p["w2"] * p["s2"]).reshape(3, 3, width, width)
    w3 = q(p["w3"] * p["s3"]).reshape(1, 1, width, cout)

    y = lax.conv_general_dilated(xq, w1, (1, 1), "VALID", dimension_numbers=dn)
    y = jnp.maximum(y + p["b1"], 0.0)
    y = lax.conv_general_dilated(y, w2, (1, 1), [(1, 1), (1, 1)], dimension_numbers=dn)
    y = jnp.maximum(y + p["b2"], 0.0)
    y = lax.conv_general_dilated(y, w3, (1, 1), "VALID", dimension_numbers=dn)
    return jnp.maximum(y + p["b3"] + xq, 0.0)


# ---------------------------------------------------------------------------
# Deterministic parameter init (folds eval-mode BatchNorm into scale/bias).
# ---------------------------------------------------------------------------
def init_params(key, inplanes, planes, base_width=64, groups=1):
    expansion = 4
    width = int(planes * (base_width / 64.0)) * groups
    cout = planes * expansion
    eps = 1e-5

    def bn_fold(k, c):
        kg, kb, km, kv = jax.random.split(k, 4)
        gamma = jax.random.uniform(kg, (1, c), jnp.float32, 0.5, 1.5)
        beta = 0.1 * jax.random.normal(kb, (1, c), jnp.float32)
        mean = 0.1 * jax.random.normal(km, (1, c), jnp.float32)
        var = jax.random.uniform(kv, (1, c), jnp.float32, 0.5, 1.5)
        scale = gamma / jnp.sqrt(var + eps)
        bias = beta - mean * scale
        return scale, bias

    k1, k2, k3, kb1, kb2, kb3 = jax.random.split(key, 6)
    w1 = 0.1 * jax.random.normal(k1, (inplanes, width), jnp.float32)
    w2 = 0.1 * jax.random.normal(k2, (9, width, width), jnp.float32)   # tap = ky*3+kx
    w3 = 0.1 * jax.random.normal(k3, (width, cout), jnp.float32)
    s1, b1 = bn_fold(kb1, width)
    s2, b2 = bn_fold(kb2, width)
    s3, b3 = bn_fold(kb3, cout)
    return {"w1": w1, "w2": w2, "w3": w3,
            "s1": s1, "b1": b1, "s2": s2, "b2": b2, "s3": s3, "b3": b3}


if __name__ == "__main__":
    key = jax.random.PRNGKey(0)
    kx, kp = jax.random.split(key)

    N, H, W = 4, 8, 8                   # N=4 -> >= 2 grid steps per TC on v7x
    planes = 8
    inplanes = planes * 4               # = 32, required for the identity add
    x_nchw = jax.random.normal(kx, (N, inplanes, H, W), jnp.float32)
    x_nhwc = jnp.transpose(x_nchw, (0, 2, 3, 1))  # NCHW -> NHWC

    params = init_params(kp, inplanes, planes)
    prep = prepare_params(params)

    out = bottleneck_forward(x_nhwc, prep)
    out = jax.block_until_ready(out)

    ref = bottleneck_ref(x_nhwc, params)
    assert out.shape == (N, H, W, planes * 4)
    # bf16 activations / output vs f32-activation reference.
    assert jnp.allclose(out.astype(jnp.float32), ref, rtol=3e-2, atol=3e-2), \
        "mismatch vs reference"

    print("KERNEL_OK")
</pallas_src>

<mosaic_0001>
module attributes {stable_mosaic.version = 11 : i64} {
  func.func @_bottleneck_kernel(%arg0: i32, %arg1: memref<1x64x32xbf16, #tpu.memory_space<vmem>>, %arg2: memref<32x128xbf16, #tpu.memory_space<vmem>>, %arg3: memref<1x128xf32, #tpu.memory_space<vmem>>, %arg4: memref<1152x8xbf16, #tpu.memory_space<vmem>>, %arg5: memref<1x8xf32, #tpu.memory_space<vmem>>, %arg6: memref<8x32xbf16, #tpu.memory_space<vmem>>, %arg7: memref<1x32xf32, #tpu.memory_space<vmem>>, %arg8: memref<1x64x32xbf16, #tpu.memory_space<vmem>>, %arg9: memref<192x128xbf16, #tpu.memory_space<vmem>>, %arg10: memref<128x1152xbf16, #tpu.memory_space<vmem>>, %arg11: memref<64x8xbf16, #tpu.memory_space<vmem>>) attributes {dimension_semantics = [#tpu.dimension_semantics<parallel>], iteration_bounds = array<i64: 4>, scalar_prefetch = 0 : i64, scratch_operands = 3 : i64, tpu.core_type = #tpu.core_type<tc>, window_params = [{transform_indices = @transform_0, window_bounds = array<i64: 1, 64, 32>}, {pipeline_mode = #tpu.pipeline_mode<synchronous>, transform_indices = @transform_1, window_bounds = array<i64: 32, 128>}, {pipeline_mode = #tpu.pipeline_mode<synchronous>, transform_indices = @transform_2, window_bounds = array<i64: 1, 128>}, {pipeline_mode = #tpu.pipeline_mode<synchronous>, transform_indices = @transform_3, window_bounds = array<i64: 1152, 8>}, {pipeline_mode = #tpu.pipeline_mode<synchronous>, transform_indices = @transform_4, window_bounds = array<i64: 1, 8>}, {pipeline_mode = #tpu.pipeline_mode<synchronous>, transform_indices = @transform_5, window_bounds = array<i64: 8, 32>}, {pipeline_mode = #tpu.pipeline_mode<synchronous>, transform_indices = @transform_6, window_bounds = array<i64: 1, 32>}, {transform_indices = @transform_7, window_bounds = array<i64: 1, 64, 32>}]} {
    %cst = arith.constant 0.000000e+00 : bf16
    %0 = vector.broadcast %cst : bf16 to vector<192x128xbf16>
    %c0 = arith.constant 0 : index
    %c0_0 = arith.constant 0 : index
    %1 = vector.load %arg9[%c0, %c0_0] : memref<192x128xbf16, #tpu.memory_space<vmem>>, vector<192x128xbf16>
    tpu.vector_store %arg9[%c0, %c0_0], %0 {strides = array<i32>} : memref<192x128xbf16, #tpu.memory_space<vmem>>, vector<192x128xbf16>,
    %c0_1 = arith.constant 0 : index
    %c0_2 = arith.constant 0 : index
    %c0_3 = arith.constant 0 : index
    %2 = vector.load %arg1[%c0_1, %c0_2, %c0_3] : memref<1x64x32xbf16, #tpu.memory_space<vmem>>, vector<1x64x32xbf16>
    %3 = vector.shape_cast %2 : vector<1x64x32xbf16> to vector<64x32xbf16>
    %c0_4 = arith.constant 0 : index
    %c0_5 = arith.constant 0 : index
    %4 = vector.load %arg2[%c0_4, %c0_5] : memref<32x128xbf16, #tpu.memory_space<vmem>>, vector<32x128xbf16>
    %cst_6 = arith.constant dense<0.000000e+00> : vector<64x128xf32>
    %5 = tpu.matmul %3, %4, %cst_6 {dimension_numbers = #tpu.dot_dimension_numbers<[1], [0], [0], [1], [0, 0, 1, 1], [], []>} : vector<64x32xbf16>, vector<32x128xbf16>, vector<64x128xf32> -> vector<64x128xf32>
    %c0_7 = arith.constant 0 : index
    %c0_8 = arith.constant 0 : index
    %6 = vector.load %arg3[%c0_7, %c0_8] : memref<1x128xf32, #tpu.memory_space<vmem>>, vector<1x128xf32>
    %7 = vector.broadcast %6 : vector<1x128xf32> to vector<64x128xf32>
    %8 = arith.addf %5, %7 : vector<64x128xf32>
    %cst_9 = arith.constant 0.000000e+00 : f32
    %9 = vector.broadcast %cst_9 : f32 to vector<64x128xf32>
    %10 = arith.maximumf %8, %9 : vector<64x128xf32>
    %11 = arith.truncf %10 : vector<64x128xf32> to vector<64x128xbf16>
    %12 = vector.extract_strided_slice %11 {offsets = [0, 0], sizes = [8, 128], strides = [1, 1]} : vector<64x128xbf16> to vector<8x128xbf16>
    %c32 = arith.constant 32 : index
    %c0_10 = arith.constant 0 : index
    %13 = vector.load %arg9[%c32, %c0_10] : memref<192x128xbf16, #tpu.memory_space<vmem>>, vector<8x128xbf16>
    tpu.vector_store %arg9[%c32, %c0_10], %12 {strides = array<i32>} : memref<192x128xbf16, #tpu.memory_space<vmem>>, vector<8x128xbf16>,
    %14 = vector.extract_strided_slice %11 {offsets = [8, 0], sizes = [8, 128], strides = [1, 1]} : vector<64x128xbf16> to vector<8x128xbf16>
    %c48 = arith.constant 48 : index
    %c0_11 = arith.constant 0 : index
    %15 = vector.load %arg9[%c48, %c0_11] : memref<192x128xbf16, #tpu.memory_space<vmem>>, vector<8x128xbf16>
    tpu.vector_store %arg9[%c48, %c0_11], %14 {strides = array<i32>} : memref<192x128xbf16, #tpu.memory_space<vmem>>, vector<8x128xbf16>,
    %16 = vector.extract_strided_slice %11 {offsets = [16, 0], sizes = [8, 128], strides = [1, 1]} : vector<64x128xbf16> to vector<8x128xbf16>
    %c64 = arith.constant 64 : index
    %c0_12 = arith.constant 0 : index
    %17 = vector.load %arg9[%c64, %c0_12] : memref<192x128xbf16, #tpu.memory_space<vmem>>, vector<8x128xbf16>
    tpu.vector_store %arg9[%c64, %c0_12], %16 {strides = array<i32>} : memref<192x128xbf16, #tpu.memory_space<vmem>>, vector<8x128xbf16>,
    %18 = vector.extract_strided_slice %11 {offsets = [24, 0], sizes = [8, 128], strides = [1, 1]} : vector<64x128xbf16> to vector<8x128xbf16>
    %c80 = arith.constant 80 : index
    %c0_13 = arith.constant 0 : index
    %19 = vector.load %arg9[%c80, %c0_13] : memref<192x128xbf16, #tpu.memory_space<vmem>>, vector<8x128xbf16>
    tpu.vector_store %arg9[%c80, %c0_13], %18 {strides = array<i32>} : memref<192x128xbf16, #tpu.memory_space<vmem>>, vector<8x128xbf16>,
    %20 = vector.extract_strided_slice %11 {offsets = [32, 0], sizes = [8, 128], strides = [1, 1]} : vector<64x128xbf16> to vector<8x128xbf16>
    %c96 = arith.constant 96 : index
    %c0_14 = arith.constant 0 : index
    %21 = vector.load %arg9[%c96, %c0_14] : memref<192x128xbf16, #tpu.memory_space<vmem>>, vector<8x128xbf16>
    tpu.vector_store %arg9[%c96, %c0_14], %20 {strides = array<i32>} : memref<192x128xbf16, #tpu.memory_space<vmem>>, vector<8x128xbf16>,
    %22 = vector.extract_strided_slice %11 {offsets = [40, 0], sizes = [8, 128], strides = [1, 1]} : vector<64x128xbf16> to vector<8x128xbf16>
    %c112 = arith.constant 112 : index
    %c0_15 = arith.constant 0 : index
    %23 = vector.load %arg9[%c112, %c0_15] : memref<192x128xbf16, #tpu.memory_space<vmem>>, vector<8x128xbf16>
    tpu.vector_store %arg9[%c112, %c0_15], %22 {strides = array<i32>} : memref<192x128xbf16, #tpu.memory_space<vmem>>, vector<8x128xbf16>,
    %24 = vector.extract_strided_slice %11 {offsets = [48, 0], sizes = [8, 128], strides = [1, 1]} : vector<64x128xbf16> to vector<8x128xbf16>
    %c128 = arith.constant 128 : index
    %c0_16 = arith.constant 0 : index
    %25 = vector.load %arg9[%c128, %c0_16] : memref<192x128xbf16, #tpu.memory_space<vmem>>, vector<8x128xbf16>
    tpu.vector_store %arg9[%c128, %c0_16], %24 {strides = array<i32>} : memref<192x128xbf16, #tpu.memory_space<vmem>>, vector<8x128xbf16>,
    %26 = vector.extract_strided_slice %11 {offsets = [56, 0], sizes = [8, 128], strides = [1, 1]} : vector<64x128xbf16> to vector<8x128xbf16>
    %c144 = arith.constant 144 : index
    %c0_17 = arith.constant 0 : index
    %27 = vector.load %arg9[%c144, %c0_17] : memref<192x128xbf16, #tpu.memory_space<vmem>>, vector<8x128xbf16>
    tpu.vector_store %arg9[%c144, %c0_17], %26 {strides = array<i32>} : memref<192x128xbf16, #tpu.memory_space<vmem>>, vector<8x128xbf16>,
    %c15 = arith.constant 15 : index
    %c0_18 = arith.constant 0 : index
    %28 = vector.load %arg9[%c15, %c0_18] : memref<192x128xbf16, #tpu.memory_space<vmem>>, vector<128x128xbf16>
    %c0_19 = arith.constant 0 : index
    %c0_20 = arith.constant 0 : index
    %29 = vector.load %arg10[%c0_19, %c0_20] : memref<128x1152xbf16, #tpu.memory_space<vmem>>, vector<128x128xbf16>
    tpu.vector_store %arg10[%c0_19, %c0_20], %28 {strides = array<i32>} : memref<128x1152xbf16, #tpu.memory_space<vmem>>, vector<128x128xbf16>,
    %c16 = arith.constant 16 : index
    %c0_21 = arith.constant 0 : index
    %30 = vector.load %arg9[%c16, %c0_21] : memref<192x128xbf16, #tpu.memory_space<vmem>>, vector<128x128xbf16>
    %c0_22 = arith.constant 0 : index
    %c128_23 = arith.constant 128 : index
    %31 = vector.load %arg10[%c0_22, %c128_23] : memref<128x1152xbf16, #tpu.memory_space<vmem>>, vector<128x128xbf16>
    tpu.vector_store %arg10[%c0_22, %c128_23], %30 {strides = array<i32>} : memref<128x1152xbf16, #tpu.memory_space<vmem>>, vector<128x128xbf16>,
    %c17 = arith.constant 17 : index
    %c0_24 = arith.constant 0 : index
    %32 = vector.load %arg9[%c17, %c0_24] : memref<192x128xbf16, #tpu.memory_space<vmem>>, vector<128x128xbf16>
    %c0_25 = arith.constant 0 : index
    %c256 = arith.constant 256 : index
    %33 = vector.load %arg10[%c0_25, %c256] : memref<128x1152xbf16, #tpu.memory_space<vmem>>, vector<128x128xbf16>
    tpu.vector_store %arg10[%c0_25, %c256], %32 {strides = array<i32>} : memref<128x1152xbf16, #tpu.memory_space<vmem>>, vector<128x128xbf16>,
    %c31 = arith.constant 31 : index
    %c0_26 = arith.constant 0 : index
    %34 = vector.load %arg9[%c31, %c0_26] : memref<192x128xbf16, #tpu.memory_space<vmem>>, vector<128x128xbf16>
    %c0_27 = arith.constant 0 : index
    %c384 = arith.constant 384 : index
    %35 = vector.load %arg10[%c0_27, %c384] : memref<128x1152xbf16, #tpu.memory_space<vmem>>, vector<128x128xbf16>
    tpu.vector_store %arg10[%c0_27, %c384], %34 {strides = array<i32>} : memref<128x1152xbf16, #tpu.memory_space<vmem>>, vector<128x128xbf16>,
    %c32_28 = arith.constant 32 : index
    %c0_29 = arith.constant 0 : index
    %36 = vector.load %arg9[%c32_28, %c0_29] : memref<192x128xbf16, #tpu.memory_space<vmem>>, vector<128x128xbf16>
    %c0_30 = arith.constant 0 : index
    %c512 = arith.constant 512 : index
    %37 = vector.load %arg10[%c0_30, %c512] : memref<128x1152xbf16, #tpu.memory_space<vmem>>, vector<128x128xbf16>
    tpu.vector_store %arg10[%c0_30, %c512], %36 {strides = array<i32>} : memref<128x1152xbf16, #tpu.memory_space<vmem>>, vector<128x128xbf16>,
    %c33 = arith.constant 33 : index
    %c0_31 = arith.constant 0 : index
    %38 = vector.load %arg9[%c33, %c0_31] : memref<192x128xbf16, #tpu.memory_space<vmem>>, vector<128x128xbf16>
    %c0_32 = arith.constant 0 : index
    %c640 = arith.constant 640 : index
    %39 = vector.load %arg10[%c0_32, %c640] : memref<128x1152xbf16, #tpu.memory_space<vmem>>, vector<128x128xbf16>
    tpu.vector_store %arg10[%c0_32, %c640], %38 {strides = array<i32>} : memref<128x1152xbf16, #tpu.memory_space<vmem>>, vector<128x128xbf16>,
    %c47 = arith.constant 47 : index
    %c0_33 = arith.constant 0 : index
    %40 = vector.load %arg9[%c47, %c0_33] : memref<192x128xbf16, #tpu.memory_space<vmem>>, vector<128x128xbf16>
    %c0_34 = arith.constant 0 : index
    %c768 = arith.constant 768 : index
    %41 = vector.load %arg10[%c0_34, %c768] : memref<128x1152xbf16, #tpu.memory_space<vmem>>, vector<128x128xbf16>
    tpu.vector_store %arg10[%c0_34, %c768], %40 {strides = array<i32>} : memref<128x1152xbf16, #tpu.memory_space<vmem>>, vector<128x128xbf16>,
    %c48_35 = arith.constant 48 : index
    %c0_36 = arith.constant 0 : index
    %42 = vector.load %arg9[%c48_35, %c0_36] : memref<192x128xbf16, #tpu.memory_space<vmem>>, vector<128x128xbf16>
    %c0_37 = arith.constant 0 : index
    %c896 = arith.constant 896 : index
    %43 = vector.load %arg10[%c0_37, %c896] : memref<128x1152xbf16, #tpu.memory_space<vmem>>, vector<128x128xbf16>
    tpu.vector_store %arg10[%c0_37, %c896], %42 {strides = array<i32>} : memref<128x1152xbf16, #tpu.memory_space<vmem>>, vector<128x128xbf16>,
    %c49 = arith.constant 49 : index
    %c0_38 = arith.constant 0 : index
    %44 = vector.load %arg9[%c49, %c0_38] : memref<192x128xbf16, #tpu.memory_space<vmem>>, vector<128x128xbf16>
    %c0_39 = arith.constant 0 : index
    %c1024 = arith.constant 1024 : index
    %45 = vector.load %arg10[%c0_39, %c1024] : memref<128x1152xbf16, #tpu.memory_space<vmem>>, vector<128x128xbf16>
    tpu.vector_store %arg10[%c0_39, %c1024], %44 {strides = array<i32>} : memref<128x1152xbf16, #tpu.memory_space<vmem>>, vector<128x128xbf16>,
    %c0_40 = arith.constant 0 : index
    %c0_41 = arith.constant 0 : index
    %46 = vector.load %arg10[%c0_40, %c0_41] : memref<128x1152xbf16, #tpu.memory_space<vmem>>, vector<128x1152xbf16>
    %c0_42 = arith.constant 0 : index
    %c0_43 = arith.constant 0 : index
    %47 = vector.load %arg4[%c0_42, %c0_43] : memref<1152x8xbf16, #tpu.memory_space<vmem>>, vector<1152x8xbf16>
    %cst_44 = arith.constant dense<0.000000e+00> : vector<128x8xf32>
    %48 = tpu.matmul %46, %47, %cst_44 {dimension_numbers = #tpu.dot_dimension_numbers<[1], [0], [0], [1], [0, 0, 1, 1], [], []>} : vector<128x1152xbf16>, vector<1152x8xbf16>, vector<128x8xf32> -> vector<128x8xf32>
    %c0_45 = arith.constant 0 : index
    %c0_46 = arith.constant 0 : index
    %49 = vector.load %arg5[%c0_45, %c0_46] : memref<1x8xf32, #tpu.memory_space<vmem>>, vector<1x8xf32>
    %50 = vector.broadcast %49 : vector<1x8xf32> to vector<128x8xf32>
    %51 = arith.addf %48, %50 : vector<128x8xf32>
    %cst_47 = arith.constant 0.000000e+00 : f32
    %52 = vector.broadcast %cst_47 : f32 to vector<128x8xf32>
    %53 = arith.maximumf %51, %52 : vector<128x8xf32>
    %54 = vector.extract_strided_slice %53 {offsets = [0, 0], sizes = [8, 8], strides = [1, 1]} : vector<128x8xf32> to vector<8x8xf32>
    %55 = arith.truncf %54 : vector<8x8xf32> to vector<8x8xbf16>
    %c0_48 = arith.constant 0 : index
    %c0_49 = arith.constant 0 : index
    %56 = vector.load %arg11[%c0_48, %c0_49] : memref<64x8xbf16, #tpu.memory_space<vmem>>, vector<8x8xbf16>
    tpu.vector_store %arg11[%c0_48, %c0_49], %55 {strides = array<i32>} : memref<64x8xbf16, #tpu.memory_space<vmem>>, vector<8x8xbf16>,
    %57 = vector.extract_strided_slice %53 {offsets = [16, 0], sizes = [8, 8], strides = [1, 1]} : vector<128x8xf32> to vector<8x8xf32>
    %58 = arith.truncf %57 : vector<8x8xf32> to vector<8x8xbf16>
    %c8 = arith.constant 8 : index
    %c0_50 = arith.constant 0 : index
    %59 = vector.load %arg11[%c8, %c0_50] : memref<64x8xbf16, #tpu.memory_space<vmem>>, vector<8x8xbf16>
    tpu.vector_store %arg11[%c8, %c0_50], %58 {strides = array<i32>} : memref<64x8xbf16, #tpu.memory_space<vmem>>, vector<8x8xbf16>,
    %60 = vector.extract_strided_slice %53 {offsets = [32, 0], sizes = [8, 8], strides = [1, 1]} : vector<128x8xf32> to vector<8x8xf32>
    %61 = arith.truncf %60 : vector<8x8xf32> to vector<8x8xbf16>
    %c16_51 = arith.constant 16 : index
    %c0_52 = arith.constant 0 : index
    %62 = vector.load %arg11[%c16_51, %c0_52] : memref<64x8xbf16, #tpu.memory_space<vmem>>, vector<8x8xbf16>
    tpu.vector_store %arg11[%c16_51, %c0_52], %61 {strides = array<i32>} : memref<64x8xbf16, #tpu.memory_space<vmem>>, vector<8x8xbf16>,
    %63 = vector.extract_strided_slice %53 {offsets = [48, 0], sizes = [8, 8], strides = [1, 1]} : vector<128x8xf32> to vector<8x8xf32>
    %64 = arith.truncf %63 : vector<8x8xf32> to vector<8x8xbf16>
    %c24 = arith.constant 24 : index
    %c0_53 = arith.constant 0 : index
    %65 = vector.load %arg11[%c24, %c0_53] : memref<64x8xbf16, #tpu.memory_space<vmem>>, vector<8x8xbf16>
    tpu.vector_store %arg11[%c24, %c0_53], %64 {strides = array<i32>} : memref<64x8xbf16, #tpu.memory_space<vmem>>, vector<8x8xbf16>,
    %66 = vector.extract_strided_slice %53 {offsets = [64, 0], sizes = [8, 8], strides = [1, 1]} : vector<128x8xf32> to vector<8x8xf32>
    %67 = arith.truncf %66 : vector<8x8xf32> to vector<8x8xbf16>
    %c32_54 = arith.constant 32 : index
    %c0_55 = arith.constant 0 : index
    %68 = vector.load %arg11[%c32_54, %c0_55] : memref<64x8xbf16, #tpu.memory_space<vmem>>, vector<8x8xbf16>
    tpu.vector_store %arg11[%c32_54, %c0_55], %67 {strides = array<i32>} : memref<64x8xbf16, #tpu.memory_space<vmem>>, vector<8x8xbf16>,
    %69 = vector.extract_strided_slice %53 {offsets = [80, 0], sizes = [8, 8], strides = [1, 1]} : vector<128x8xf32> to vector<8x8xf32>
    %70 = arith.truncf %69 : vector<8x8xf32> to vector<8x8xbf16>
    %c40 = arith.constant 40 : index
    %c0_56 = arith.constant 0 : index
    %71 = vector.load %arg11[%c40, %c0_56] : memref<64x8xbf16, #tpu.memory_space<vmem>>, vector<8x8xbf16>
    tpu.vector_store %arg11[%c40, %c0_56], %70 {strides = array<i32>} : memref<64x8xbf16, #tpu.memory_space<vmem>>, vector<8x8xbf16>,
    %72 = vector.extract_strided_slice %53 {offsets = [96, 0], sizes = [8, 8], strides = [1, 1]} : vector<128x8xf32> to vector<8x8xf32>
    %73 = arith.truncf %72 : vector<8x8xf32> to vector<8x8xbf16>
    %c48_57 = arith.constant 48 : index
    %c0_58 = arith.constant 0 : index
    %74 = vector.load %arg11[%c48_57, %c0_58] : memref<64x8xbf16, #tpu.memory_space<vmem>>, vector<8x8xbf16>
    tpu.vector_store %arg11[%c48_57, %c0_58], %73 {strides = array<i32>} : memref<64x8xbf16, #tpu.memory_space<vmem>>, vector<8x8xbf16>,
    %75 = vector.extract_strided_slice %53 {offsets = [112, 0], sizes = [8, 8], strides = [1, 1]} : vector<128x8xf32> to vector<8x8xf32>
    %76 = arith.truncf %75 : vector<8x8xf32> to vector<8x8xbf16>
    %c56 = arith.constant 56 : index
    %c0_59 = arith.constant 0 : index
    %77 = vector.load %arg11[%c56, %c0_59] : memref<64x8xbf16, #tpu.memory_space<vmem>>, vector<8x8xbf16>
    tpu.vector_store %arg11[%c56, %c0_59], %76 {strides = array<i32>} : memref<64x8xbf16, #tpu.memory_space<vmem>>, vector<8x8xbf16>,
    %c0_60 = arith.constant 0 : index
    %c0_61 = arith.constant 0 : index
    %78 = vector.load %arg11[%c0_60, %c0_61] : memref<64x8xbf16, #tpu.memory_space<vmem>>, vector<64x8xbf16>
    %c0_62 = arith.constant 0 : index
    %c0_63 = arith.constant 0 : index
    %79 = vector.load %arg6[%c0_62, %c0_63] : memref<8x32xbf16, #tpu.memory_space<vmem>>, vector<8x32xbf16>
    %cst_64 = arith.constant dense<0.000000e+00> : vector<64x32xf32>
    %80 = tpu.matmul %78, %79, %cst_64 {dimension_numbers = #tpu.dot_dimension_numbers<[1], [0], [0], [1], [0, 0, 1, 1], [], []>} : vector<64x8xbf16>, vector<8x32xbf16>, vector<64x32xf32> -> vector<64x32xf32>
    %c0_65 = arith.constant 0 : index
    %c0_66 = arith.constant 0 : index
    %81 = vector.load %arg7[%c0_65, %c0_66] : memref<1x32xf32, #tpu.memory_space<vmem>>, vector<1x32xf32>
    %82 = vector.broadcast %81 : vector<1x32xf32> to vector<64x32xf32>
    %83 = arith.addf %80, %82 : vector<64x32xf32>
    %84 = arith.extf %3 : vector<64x32xbf16> to vector<64x32xf32>
    %85 = arith.addf %83, %84 : vector<64x32xf32>
    %cst_67 = arith.constant 0.000000e+00 : f32
    %86 = vector.broadcast %cst_67 : f32 to vector<64x32xf32>
    %87 = arith.maximumf %85, %86 : vector<64x32xf32>
    %88 = arith.truncf %87 : vector<64x32xf32> to vector<64x32xbf16>
    %c0_68 = arith.constant 0 : index
    %c0_69 = arith.constant 0 : index
    %c0_70 = arith.constant 0 : index
    %89 = vector.load %arg8[%c0_68, %c0_69, %c0_70] : memref<1x64x32xbf16, #tpu.memory_space<vmem>>, vector<1x64x32xbf16>
    %90 = vector.shape_cast %89 : vector<1x64x32xbf16> to vector<64x32xbf16>
    %91 = vector.shape_cast %88 : vector<64x32xbf16> to vector<1x64x32xbf16>
    tpu.vector_store %arg8[%c0_68, %c0_69, %c0_70], %91 {strides = array<i32>} : memref<1x64x32xbf16, #tpu.memory_space<vmem>>, vector<1x64x32xbf16>,
    return
  }
  func.func @transform_0(%arg0: i32) -> (i32, i32, i32) {
    %c0_i32 = arith.constant 0 : i32
    %c0_i32_0 = arith.constant 0 : i32
    %c0_i32_1 = arith.constant 0 : i32
    return %arg0, %c0_i32, %c0_i32_0 : i32, i32, i32
  }
  func.func @transform_1(%arg0: i32) -> (i32, i32) {
    %c0_i32 = arith.constant 0 : i32
    %c0_i32_0 = arith.constant 0 : i32
    %c0_i32_1 = arith.constant 0 : i32
    return %c0_i32, %c0_i32_0 : i32, i32
  }
  func.func @transform_2(%arg0: i32) -> (i32, i32) {
    %c0_i32 = arith.constant 0 : i32
    %c0_i32_0 = arith.constant 0 : i32
    %c0_i32_1 = arith.constant 0 : i32
    return %c0_i32, %c0_i32_0 : i32, i32
  }
  func.func @transform_3(%arg0: i32) -> (i32, i32) {
    %c0_i32 = arith.constant 0 : i32
    %c0_i32_0 = arith.constant 0 : i32
    %c0_i32_1 = arith.constant 0 : i32
    return %c0_i32, %c0_i32_0 : i32, i32
  }
  func.func @transform_4(%arg0: i32) -> (i32, i32) {
    %c0_i32 = arith.constant 0 : i32
    %c0_i32_0 = arith.constant 0 : i32
    %c0_i32_1 = arith.constant 0 : i32
    return %c0_i32, %c0_i32_0 : i32, i32
  }
  func.func @transform_5(%arg0: i32) -> (i32, i32) {
    %c0_i32 = arith.constant 0 : i32
    %c0_i32_0 = arith.constant 0 : i32
    %c0_i32_1 = arith.constant 0 : i32
    return %c0_i32, %c0_i32_0 : i32, i32
  }
  func.func @transform_6(%arg0: i32) -> (i32, i32) {
    %c0_i32 = arith.constant 0 : i32
    %c0_i32_0 = arith.constant 0 : i32
    %c0_i32_1 = arith.constant 0 : i32
    return %c0_i32, %c0_i32_0 : i32, i32
  }
  func.func @transform_7(%arg0: i32) -> (i32, i32, i32) {
    %c0_i32 = arith.constant 0 : i32
    %c0_i32_0 = arith.constant 0 : i32
    %c0_i32_1 = arith.constant 0 : i32
    return %arg0, %c0_i32, %c0_i32_0 : i32, i32, i32
  }
}

</mosaic_0001>

<llo_original>
// kernel: bottleneck_forward.1
$region0: #{bottleneck_forward.1}
  #allocation0 [shape = 'u32[]', space=smem, size = 0x4, offset = 0x4, fixed_abs, tag = 'smem constant byte address 0x4 - core index']
  #allocation1 [shape = 'u32[144,128]{1,0:T(1,128)}', space=vmem, size = 0x12000, scoped, tag = 'internal scratch']
  #allocation2 [shape = 'bf16[192,128]{1,0:T(16,128)(2,1)}', space=vmem, size = 0xc000, scoped, tag = 'scratch operand']
  #allocation3 [shape = 'bf16[128,1152]{1,0:T(16,128)(2,1)}', space=vmem, size = 0x48000, scoped, tag = 'scratch operand']
  #allocation4 [shape = 'bf16[64,8]{1,0:T(16,128)(2,1)}', space=vmem, size = 0x4000, scoped, tag = 'scratch operand']
  %s0 = inlined_call_operand.vmem [shape: bf16[4,64,32], index: 0, kind: input, shape index: {}]
  %s1 = inlined_call_operand.vmem [shape: bf16[32,128], index: 1, kind: input, shape index: {}]
  %s2 = inlined_call_operand.vmem [shape: f32[1,128], index: 2, kind: input, shape index: {}]
  %s3 = inlined_call_operand.vmem [shape: bf16[1152,8], index: 3, kind: input, shape index: {}]
  %s4 = inlined_call_operand.vmem [shape: f32[1,8], index: 4, kind: input, shape index: {}]
  %s5 = inlined_call_operand.vmem [shape: bf16[8,32], index: 5, kind: input, shape index: {}]
  %s6 = inlined_call_operand.vmem [shape: f32[1,32], index: 6, kind: input, shape index: {}]
  %s7 = inlined_call_operand.hbm [shape: bf16[4,64,32], index: 7, kind: output, shape index: {}]
  %s8 = sld [smem:[#allocation0]]
  $region61: #{bottleneck_forward.1} parent=0
    _
  %s10 = ssub.s32 1, %s8
  %s11 = scalar_select 0, %s10, %s8
  $region1: #{bottleneck_forward.1} parent=0
    #allocation5 [shape = 'u8[32768]{0}', space=vmem, size = 0x8000, scoped, tag = 'output window, operand 0']
    #allocation6 [shape = 's32[2]{0}', space=sflag, size = 0x8, scoped, tag = 'scoped memory for bottleneck_forward.1']
    %12 = vsyncpa [#allocation6], 0
    %s13 = scalar_lea.sflag [#allocation6], 1
    %14 = vsyncpa %s13, 0
    loop: start=0, step=1, limit=6
    $region2: #{bottleneck_forward.1} parent=1 // loop_pre_header
      _
    $region3: #{bottleneck_forward.1} parent=1 // loop_header
      %s16 = sphi 0, %s20
      %p17 = scmp.ge.s32.totalorder %s16, 6
      %s26 = sphi 0, %s28
      %s29 = sphi 0, %s26
      %s30 = sphi 0, %s29
      %s46 = sphi 0, %s30
      %s50 = sphi 0, %s50
      %s52 = sphi 0, %s50
      %s53 = sphi 0, %s52
      %s67 = sphi 0, %s53
      %s71 = sphi 0, %s71
      %s73 = sphi 0, %s71
      %s74 = sphi 0, %s73
      %s88 = sphi 0, %s74
      %s92 = sphi 0, %s92
      %s94 = sphi 0, %s92
      %s95 = sphi 0, %s94
      %s109 = sphi 0, %s95
      %s113 = sphi 0, %s113
      %s115 = sphi 0, %s113
      %s116 = sphi 0, %s115
      %s130 = sphi 0, %s116
      %s134 = sphi 0, %s134
      %s136 = sphi 0, %s134
      %s137 = sphi 0, %s136
      %s151 = sphi 0, %s137
      %s155 = sphi 0, %s155
      %s157 = sphi 0, %s155
      %s158 = sphi 0, %s157
      %s172 = sphi 0, %s158
      %s178 = sphi 0, %s180
      %s181 = sphi 0, %s178
      %s182 = sphi 0, %s181
      %s198 = sphi 0, %s182
    $region4: #{bottleneck_forward.1} parent=1 // loop_header_branch
      %19 = sbr.rel (%p17) target = $region8
    $region5: #{bottleneck_forward.1} parent=1 // loop_body
      %s21 = ssub.s32 %s16, 1
      %s22 = ssub.s32 %s16, 2
      %s23 = sadd.s32 %s16, 1
      %s24 = ssub.s32 %s16, %s23
      %p25 = scmp.eq.s32.totalorder %s24, 0
      %s27 = sadd.s32 %s26, 1
      %s28 = scalar_select %p25, %s26, %s27
      %p31 = pneg %p25
      %p32 = scmp.eq.s32.totalorder %s16, 3
      %p33 = por %p31, %p32
      %p34 = scmp.ne.s32.totalorder %s26, %s29
      %p35 = scmp.eq.s32.totalorder %s16, 0
      %p36 = por %p34, %p35
      %p37 = scmp.ne.s32.totalorder %s26, %s29
      %p38 = scmp.eq.s32.totalorder %s21, 3
      %p39 = por %p37, %p38
      %p40 = scmp.ne.s32.totalorder %s29, %s30
      %p41 = scmp.eq.s32.totalorder %s21, 0
      %p42 = por %p40, %p41
      %p43 = scmp.ne.s32.totalorder %s29, %s30
      %p44 = scmp.eq.s32.totalorder %s22, 3
      %p45 = por %p43, %p44
      %p47 = scmp.ne.s32.totalorder %s30, %s46
      %p48 = scmp.eq.s32.totalorder %s22, 0
      %p49 = por %p47, %p48
      %s51 = sadd.s32 %s50, 1
      %p54 = scmp.eq.s32.totalorder %s16, 3
      %p55 = scmp.ne.s32.totalorder %s50, %s52
      %p56 = scmp.eq.s32.totalorder %s16, 0
      %p57 = por %p55, %p56
      %p58 = scmp.ne.s32.totalorder %s50, %s52
      %p59 = scmp.eq.s32.totalorder %s21, 3
      %p60 = por %p58, %p59
      %p61 = scmp.ne.s32.totalorder %s52, %s53
      %p62 = scmp.eq.s32.totalorder %s21, 0
      %p63 = por %p61, %p62
      %p64 = scmp.ne.s32.totalorder %s52, %s53
      %p65 = scmp.eq.s32.totalorder %s22, 3
      %p66 = por %p64, %p65
      %p68 = scmp.ne.s32.totalorder %s53, %s67
      %p69 = scmp.eq.s32.totalorder %s22, 0
      %p70 = por %p68, %p69
      %s72 = sadd.s32 %s71, 1
      %p75 = scmp.eq.s32.totalorder %s16, 3
      %p76 = scmp.ne.s32.totalorder %s71, %s73
      %p77 = scmp.eq.s32.totalorder %s16, 0
      %p78 = por %p76, %p77
      %p79 = scmp.ne.s32.totalorder %s71, %s73
      %p80 = scmp.eq.s32.totalorder %s21, 3
      %p81 = por %p79, %p80
      %p82 = scmp.ne.s32.totalorder %s73, %s74
      %p83 = scmp.eq.s32.totalorder %s21, 0
      %p84 = por %p82, %p83
      %p85 = scmp.ne.s32.totalorder %s73, %s74
      %p86 = scmp.eq.s32.totalorder %s22, 3
      %p87 = por %p85, %p86
      %p89 = scmp.ne.s32.totalorder %s74, %s88
      %p90 = scmp.eq.s32.totalorder %s22, 0
      %p91 = por %p89, %p90
      %s93 = sadd.s32 %s92, 1
      %p96 = scmp.eq.s32.totalorder %s16, 3
      %p97 = scmp.ne.s32.totalorder %s92, %s94
      %p98 = scmp.eq.s32.totalorder %s16, 0
      %p99 = por %p97, %p98
      %p100 = scmp.ne.s32.totalorder %s92, %s94
      %p101 = scmp.eq.s32.totalorder %s21, 3
      %p102 = por %p100, %p101
      %p103 = scmp.ne.s32.totalorder %s94, %s95
      %p104 = scmp.eq.s32.totalorder %s21, 0
      %p105 = por %p103, %p104
      %p106 = scmp.ne.s32.totalorder %s94, %s95
      %p107 = scmp.eq.s32.totalorder %s22, 3
      %p108 = por %p106, %p107
      %p110 = scmp.ne.s32.totalorder %s95, %s109
      %p111 = scmp.eq.s32.totalorder %s22, 0
      %p112 = por %p110, %p111
      %s114 = sadd.s32 %s113, 1
      %p117 = scmp.eq.s32.totalorder %s16, 3
      %p118 = scmp.ne.s32.totalorder %s113, %s115
      %p119 = scmp.eq.s32.totalorder %s16, 0
      %p120 = por %p118, %p119
      %p121 = scmp.ne.s32.totalorder %s113, %s115
      %p122 = scmp.eq.s32.totalorder %s21, 3
      %p123 = por %p121, %p122
      %p124 = scmp.ne.s32.totalorder %s115, %s116
      %p125 = scmp.eq.s32.totalorder %s21, 0
      %p126 = por %p124, %p125
      %p127 = scmp.ne.s32.totalorder %s115, %s116
      %p128 = scmp.eq.s32.totalorder %s22, 3
      %p129 = por %p127, %p128
      %p131 = scmp.ne.s32.totalorder %s116, %s130
      %p132 = scmp.eq.s32.totalorder %s22, 0
      %p133 = por %p131, %p132
      %s135 = sadd.s32 %s134, 1
      %p138 = scmp.eq.s32.totalorder %s16, 3
      %p139 = scmp.ne.s32.totalorder %s134, %s136
      %p140 = scmp.eq.s32.totalorder %s16, 0
      %p141 = por %p139, %p140
      %p142 = scmp.ne.s32.totalorder %s134, %s136
      %p143 = scmp.eq.s32.totalorder %s21, 3
      %p144 = por %p142, %p143
      %p145 = scmp.ne.s32.totalorder %s136, %s137
      %p146 = scmp.eq.s32.totalorder %s21, 0
      %p147 = por %p145, %p146
      %p148 = scmp.ne.s32.totalorder %s136, %s137
      %p149 = scmp.eq.s32.totalorder %s22, 3
      %p150 = por %p148, %p149
      %p152 = scmp.ne.s32.totalorder %s137, %s151
      %p153 = scmp.eq.s32.totalorder %s22, 0
      %p154 = por %p152, %p153
      %s156 = sadd.s32 %s155, 1
      %p159 = scmp.eq.s32.totalorder %s16, 3
      %p160 = scmp.ne.s32.totalorder %s155, %s157
      %p161 = scmp.eq.s32.totalorder %s16, 0
      %p162 = por %p160, %p161
      %p163 = scmp.ne.s32.totalorder %s155, %s157
      %p164 = scmp.eq.s32.totalorder %s21, 3
      %p165 = por %p163, %p164
      %p166 = scmp.ne.s32.totalorder %s157, %s158
      %p167 = scmp.eq.s32.totalorder %s21, 0
      %p168 = por %p166, %p167
      %p169 = scmp.ne.s32.totalorder %s157, %s158
      %p170 = scmp.eq.s32.totalorder %s22, 3
      %p171 = por %p169, %p170
      %p173 = scmp.ne.s32.totalorder %s158, %s172
      %p174 = scmp.eq.s32.totalorder %s22, 0
      %p175 = por %p173, %p174
      %s176 = ssub.s32 %s16, %s23
      %p177 = scmp.eq.s32.totalorder %s176, 0
      %s179 = sadd.s32 %s178, 1
      %s180 = scalar_select %p177, %s178, %s179
      %p183 = pneg %p177
      %p184 = scmp.eq.s32.totalorder %s16, 3
      %p185 = por %p183, %p184
      %p186 = scmp.ne.s32.totalorder %s178, %s181
      %p187 = scmp.eq.s32.totalorder %s16, 0
      %p188 = por %p186, %p187
      %p189 = scmp.ne.s32.totalorder %s178, %s181
      %p190 = scmp.eq.s32.totalorder %s21, 3
      %p191 = por %p189, %p190
      %p192 = scmp.ne.s32.totalorder %s181, %s182
      %p193 = scmp.eq.s32.totalorder %s21, 0
      %p194 = por %p192, %p193
      %p195 = scmp.ne.s32.totalorder %s181, %s182
      %p196 = scmp.eq.s32.totalorder %s22, 3
      %p197 = por %p195, %p196
      %p199 = scmp.ne.s32.totalorder %s182, %s198
      %p200 = scmp.eq.s32.totalorder %s22, 0
      %p201 = por %p199, %p200
      %p202 = scmp.le.s32.totalorder 1, %s16
      %p203 = scmp.lt.s32.totalorder %s16, 5
      %p204 = pnand %p202, %p203
      %p205 = pneg %p204
      // Predicated region
      $region9: #{bottleneck_forward.1} parent=5 // pred_check
        _
      $region10: #{bottleneck_forward.1} parent=5 // pred_check_branch
        %207 = sbr.rel (%p204) target = $region12
      $region11: #{bottleneck_forward.1} parent=5 // pred_region
        %s208 = ssub.s32 %s16, 1
        // Predicated region
        $region13: #{bottleneck_forward.1} parent=11 // pred_check
          %p209 = pneg %p63
        $region14: #{bottleneck_forward.1} parent=11 // pred_check_branch
          %211 = sbr.rel (%p209) target = $region16
        $region15: #{bottleneck_forward.1} parent=11 // pred_region
          _
        $region16: #{bottleneck_forward.1} parent=11 // pred_fallthru
          _
        // Predicated region
        $region17: #{bottleneck_forward.1} parent=11 // pred_check
          %p212 = pneg %p84
        $region18: #{bottleneck_forward.1} parent=11 // pred_check_branch
          %214 = sbr.rel (%p212) target = $region20
        $region19: #{bottleneck_forward.1} parent=11 // pred_region
          _
        $region20: #{bottleneck_forward.1} parent=11 // pred_fallthru
          _
        // Predicated region
        $region21: #{bottleneck_forward.1} parent=11 // pred_check
          %p215 = pneg %p105
        $region22: #{bottleneck_forward.1} parent=11 // pred_check_branch
          %217 = sbr.rel (%p215) target = $region24
        $region23: #{bottleneck_forward.1} parent=11 // pred_region
          _
        $region24: #{bottleneck_forward.1} parent=11 // pred_fallthru
          _
        // Predicated region
        $region25: #{bottleneck_forward.1} parent=11 // pred_check
          %p218 = pneg %p126
        $region26: #{bottleneck_forward.1} parent=11 // pred_check_branch
          %220 = sbr.rel (%p218) target = $region28
        $region27: #{bottleneck_forward.1} parent=11 // pred_region
          _
        $region28: #{bottleneck_forward.1} parent=11 // pred_fallthru
          _
        // Predicated region
        $region29: #{bottleneck_forward.1} parent=11 // pred_check
          %p221 = pneg %p147
        $region30: #{bottleneck_forward.1} parent=11 // pred_check_branch
          %223 = sbr.rel (%p221) target = $region32
        $region31: #{bottleneck_forward.1} parent=11 // pred_region
          _
        $region32: #{bottleneck_forward.1} parent=11 // pred_fallthru
          _
        // Predicated region
        $region33: #{bottleneck_forward.1} parent=11 // pred_check
          %p224 = pneg %p168
        $region34: #{bottleneck_forward.1} parent=11 // pred_check_branch
          %226 = sbr.rel (%p224) target = $region36
        $region35: #{bottleneck_forward.1} parent=11 // pred_region
          _
        $region36: #{bottleneck_forward.1} parent=11 // pred_fallthru
          _
      $region12: #{bottleneck_forward.1} parent=5 // pred_fallthru
        _
      %p227 = scmp.lt.s32.totalorder %s16, 4
      // Predicated region
      $region37: #{bottleneck_forward.1} parent=5 // pred_check
        %p228 = pneg %p227
      $region38: #{bottleneck_forward.1} parent=5 // pred_check_branch
        %230 = sbr.rel (%p228) target = $region40
      $region39: #{bottleneck_forward.1} parent=5 // pred_region
        // Predicated region
        $region41: #{bottleneck_forward.1} parent=39 // pred_check
          %p231 = pneg %p36
        $region42: #{bottleneck_forward.1} parent=39 // pred_check_branch
          %233 = sbr.rel (%p231) target = $region44
        $region43: #{bottleneck_forward.1} parent=39 // pred_region
          %p234 = scmp.lt.s32.totalorder %s16, 3
          %s235 = scalar_select %p234, %s16, 3
          %s236 = smul.addr %s235, 8
          %s237 = smul.addr %s236, 4
          %s238 = scalar_lea.vmem %s0, %s237
        $region44: #{bottleneck_forward.1} parent=39 // pred_fallthru
          _
      $region40: #{bottleneck_forward.1} parent=5 // pred_fallthru
        _
      %p239 = scmp.le.s32.totalorder 1, %s16
      %p240 = scmp.lt.s32.totalorder %s16, 5
      %p241 = pnand %p239, %p240
      %p242 = pneg %p241
      // Predicated region
      $region45: #{bottleneck_forward.1} parent=5 // pred_check
        _
      $region46: #{bottleneck_forward.1} parent=5 // pred_check_branch
        %244 = sbr.rel (%p241) target = $region48
      $region47: #{bottleneck_forward.1} parent=5 // pred_region
        %s245 = ssub.s32 %s16, 1
        %p246 = scmp.lt.s32.totalorder %s21, 3
        %s247 = scalar_select %p246, %s21, 3
        %s248 = smul.addr %s247, 8
        %s249 = smul.addr %s248, 4
        %s250 = scalar_lea.vmem %s0, %s249
        %p251 = pneg %p42
        %p252 = pneg %p39
        %p253 = pneg %p63
        %p254 = pneg %p60
        %p255 = pneg %p84
        %p256 = pneg %p81
        %p257 = pneg %p105
        %p258 = pneg %p102
        %p259 = pneg %p126
        %p260 = pneg %p123
        %p261 = pneg %p147
        %p262 = pneg %p144
        %p263 = pneg %p168
        %p264 = pneg %p165
        %p265 = pneg %p194
        %p266 = pneg %p191
        %s267 = sand.u32 %s181, 1
        %s268 = scalar_lea.sflag [#allocation6], %s267
        %s269 = sand.u32 %s181, 1
        %s270 = smul.addr %s269, 32
        %s271 = scalar_lea.vmem [#allocation5], %s270
        %p272 = scmp.lt.s32.totalorder %s21, 3
        %s273 = scalar_select %p272, %s21, 3
        %s274 = smul.addr %s273, 8
        %s275 = smul.addr %s274, 4
        %s276 = scalar_lea.vmem %s0, %s275
        %278 = vst [vmem:[#allocation2] sm:$0xff] 0
        %279 = vst [vmem:[#allocation2 + $0x8] sm:$0xff] 0
        %280 = vst [vmem:[#allocation2 + $0x10] sm:$0xff] 0
        %281 = vst [vmem:[#allocation2 + $0x18] sm:$0xff] 0
        %282 = vst [vmem:[#allocation2 + $0x20] sm:$0xff] 0
        %283 = vst [vmem:[#allocation2 + $0x28] sm:$0xff] 0
        %284 = vst [vmem:[#allocation2 + $0x30] sm:$0xff] 0
        %285 = vst [vmem:[#allocation2 + $0x38] sm:$0xff] 0
        %286 = vst [vmem:[#allocation2 + $0x40] sm:$0xff] 0
        %287 = vst [vmem:[#allocation2 + $0x48] sm:$0xff] 0
        %288 = vst [vmem:[#allocation2 + $0x50] sm:$0xff] 0
        %289 = vst [vmem:[#allocation2 + $0x58] sm:$0xff] 0
        %v290 = vld [vmem:[%s276] sm:$0xf]
        %v291 = vld [vmem:[%s276 + $0x4] sm:$0xf]
        %v292 = vld [vmem:[%s276 + $0x8] sm:$0xf]
        %v293 = vld [vmem:[%s276 + $0xc] sm:$0xf]
        %v294 = vld [vmem:[%s276 + $0x10] sm:$0xf]
        %v295 = vld [vmem:[%s276 + $0x14] sm:$0xf]
        %v296 = vld [vmem:[%s276 + $0x18] sm:$0xf]
        %v297 = vld [vmem:[%s276 + $0x1c] sm:$0xf]
        %v298 = vld [vmem:[%s1] sm:$0xf]
        %v299 = vld [vmem:[%s1 + $0x4] sm:$0xf]
        %v300 = vld [vmem:[%s1 + $0x8] sm:$0xf]
        %v301 = vld [vmem:[%s1 + $0xc] sm:$0xf]
        %v302 = vld [vmem:[%s2] sm:$0x1]
        %v304 = vlaneseq
        %v305 = vshrl.u32 %v304, 7
        %v306 = vsub.s32 0, %v305
        %v307 = vrot.slane %v302, %v306
        %v317 = vunpack.c.l.b16 %v290
        %v318 = vunpack.c.l.b16 %v291
        %v319 = vunpack.c.l.b16 %v292
        %v320 = vunpack.c.l.b16 %v293
        %v321 = vunpack.c.l.b16 %v294
        %v322 = vunpack.c.l.b16 %v295
        %v323 = vunpack.c.l.b16 %v296
        %v324 = vunpack.c.l.b16 %v297
        %v325 = vpack.c.b16 %v318, %v317
        %v326 = vpack.c.b16 %v320, %v319
        %v327 = vpack.c.b16 %v322, %v321
        %v328 = vpack.c.b16 %v324, %v323
        %v333 = vunpack.c.l.b16 %v298
        %v334 = vunpack.c.l.b16 %v299
        %v335 = vunpack.c.l.b16 %v300
        %v336 = vunpack.c.l.b16 %v301
        %v337 = vpack.c.b16 %v334, %v333
        %v338 = vpack.c.b16 %v336, %v335
        %vm341 = vcmask 261120
        %v343 = vsel %vm341, %v325, 0
        %v346 = vsel %vm341, %v326, 0
        %v349 = vsel %vm341, %v327, 0
        %v352 = vsel %vm341, %v328, 0
        %354 = vmatprep.subr.bf16.mxu0 0
        %355 = vmatpush1.bf16.msra.mxu0 %v337
        %356 = vmatprep.subr.bf16.mxu0 0
        %357 = vmatpush1.bf16.msra.mxu0 %v338
        %358 = vmatprep.subr.bf16.mxu0 0
        %359 = vmatpush1.bf16.msra.mxu0 0
        %360 = vmatprep.subr.bf16.mxu0 0
        %361 = vmatpush1.bf16.msra.mxu0 0
        %362 = vmatprep.subr.bf16.mxu0 0
        %363 = vmatpush1.bf16.msra.mxu0 0
        %364 = vmatprep.subr.bf16.mxu0 0
        %365 = vmatpush1.bf16.msra.mxu0 0
        %366 = vmatprep.subr.bf16.mxu0 0
        %367 = vmatpush1.bf16.msra.mxu0 0
        %368 = vmatprep.subr.bf16.mxu0 0
        %369 = vmatpush1.bf16.msra.mxu0 0
        %370 = vmatprep.subr.bf16.mxu0 0
        %371 = vmatpush1.bf16.msra.mxu0 0
        %372 = vmatprep.subr.bf16.mxu0 0
        %373 = vmatpush1.bf16.msra.mxu0 0
        %374 = vmatprep.subr.bf16.mxu0 0
        %375 = vmatpush1.bf16.msra.mxu0 0
        %376 = vmatprep.subr.bf16.mxu0 0
        %377 = vmatpush1.bf16.msra.mxu0 0
        %378 = vmatprep.subr.bf16.mxu0 0
        %379 = vmatpush1.bf16.msra.mxu0 0
        %380 = vmatprep.subr.bf16.mxu0 0
        %381 = vmatpush1.bf16.msra.mxu0 0
        %382 = vmatprep.subr.bf16.mxu0 0
        %383 = vmatpush1.bf16.msra.mxu0 0
        %384 = vmatprep.subr.bf16.mxu0 0
        %385 = vmatpush1.bf16.msra.mxu0 0
        %386 = vmatprep.mubr.bf16.mxu0 0
        %387 = vmatmul.mubr.bf16.gmra.mrb[0].mxu0 %v343
        %v388 = vpop.f32.mrb[0].mxu0
        %v389 = vadd.f32 %v307, %v388
        %v390 = vpop.f32.mrb[0].mxu0
        %v391 = vpop.f32.mrb[0].mxu0
        %v392 = vadd.f32 %v307, %v391
        %v393 = vpop.f32.mrb[0].mxu0
        %394 = vmatprep.mubr.bf16.mxu0 0
        %395 = vmatmul.mubr.bf16.gmra.mrb[0].mxu0 %v346
        %v396 = vpop.f32.mrb[0].mxu0
        %v397 = vadd.f32 %v307, %v396
        %v398 = vpop.f32.mrb[0].mxu0
        %v399 = vpop.f32.mrb[0].mxu0
        %v400 = vadd.f32 %v307, %v399
        %v401 = vpop.f32.mrb[0].mxu0
        %402 = vmatprep.mubr.bf16.mxu0 0
        %403 = vmatmul.mubr.bf16.gmra.mrb[0].mxu0 %v349
        %v404 = vpop.f32.mrb[0].mxu0
        %v405 = vadd.f32 %v307, %v404
        %v406 = vpop.f32.mrb[0].mxu0
        %v407 = vpop.f32.mrb[0].mxu0
        %v408 = vadd.f32 %v307, %v407
        %v409 = vpop.f32.mrb[0].mxu0
        %410 = vmatprep.mubr.bf16.mxu0 0
        %411 = vmatmul.mubr.bf16.gmra.mrb[0].mxu0 %v352
        %v412 = vpop.f32.mrb[0].mxu0
        %v413 = vadd.f32 %v307, %v412
        %v414 = vpop.f32.mrb[0].mxu0
        %v415 = vpop.f32.mrb[0].mxu0
        %v416 = vadd.f32 %v307, %v415
        %v417 = vpop.f32.mrb[0].mxu0
        %418 = vdwg.mxu0
        %v419 = vmax.f32 %v389, 0.0
        %v420 = vmax.f32 %v392, 0.0
        %v421 = vmax.f32 %v397, 0.0
        %v422 = vmax.f32 %v400, 0.0
        %v423 = vmax.f32 %v405, 0.0
        %v424 = vmax.f32 %v408, 0.0
        %v425 = vmax.f32 %v413, 0.0
        %v426 = vmax.f32 %v416, 0.0
        %v427 = vpack.c.bf16 %v420, %v419
        %v428 = vpack.c.bf16 %v422, %v421
        %v429 = vpack.c.bf16 %v424, %v423
        %v430 = vpack.c.bf16 %v426, %v425
        %431 = vst [vmem:[#allocation2 + $0x10] sm:$0xf] %v427
        %v433 = vrot.slane %v427, 4
        %435 = vst [vmem:[#allocation2 + $0x18] sm:$0xf] %v433
        %436 = vst [vmem:[#allocation2 + $0x20] sm:$0xf] %v428
        %v438 = vrot.slane %v428, 4
        %440 = vst [vmem:[#allocation2 + $0x28] sm:$0xf] %v438
        %441 = vst [vmem:[#allocation2 + $0x30] sm:$0xf] %v429
        %v443 = vrot.slane %v429, 4
        %445 = vst [vmem:[#allocation2 + $0x38] sm:$0xf] %v443
        %446 = vst [vmem:[#allocation2 + $0x40] sm:$0xf] %v430
        %v448 = vrot.slane %v430, 4
        %450 = vst [vmem:[#allocation2 + $0x48] sm:$0xf] %v448
        %v451 = vld [vmem:[#allocation2] sm:$0x80]
        %v452 = vld [vmem:[#allocation2 + $0x8] sm:$0xff]
        %v453 = vld [vmem:[#allocation2 + $0x10] sm:$0xff]
        %v454 = vld [vmem:[#allocation2 + $0x18] sm:$0xff]
        %v455 = vld [vmem:[#allocation2 + $0x20] sm:$0xff]
        %v456 = vld [vmem:[#allocation2 + $0x28] sm:$0xff]
        %v457 = vld [vmem:[#allocation2 + $0x30] sm:$0xff]
        %v458 = vld [vmem:[#allocation2 + $0x38] sm:$0xff]
        %v459 = vld [vmem:[#allocation2 + $0x40] sm:$0xff]
        %vm460 = vsmask.f32 256
        %v462 = vshrl.u32 %v451, 16
        %v464 = vrot.slane %v462, 7
        %v466 = vshrl.u32 %v452, 16
        %v468 = vrot.slane %v466, 7
        %v469 = vshll.u32 %v452, 16
        %v471 = vor.u32 %v468, %v469
        %v472 = vsel %vm460, %v464, %v471
        %v474 = vshrl.u32 %v453, 16
        %v476 = vrot.slane %v474, 7
        %v477 = vshll.u32 %v453, 16
        %v479 = vor.u32 %v476, %v477
        %v480 = vsel %vm460, %v468, %v479
        %v482 = vshrl.u32 %v454, 16
        %v484 = vrot.slane %v482, 7
        %v485 = vshll.u32 %v454, 16
        %v487 = vor.u32 %v484, %v485
        %v488 = vsel %vm460, %v476, %v487
        %v490 = vshrl.u32 %v455, 16
        %v492 = vrot.slane %v490, 7
        %v493 = vshll.u32 %v455, 16
        %v495 = vor.u32 %v492, %v493
        %v496 = vsel %vm460, %v484, %v495
        %v498 = vshrl.u32 %v456, 16
        %v500 = vrot.slane %v498, 7
        %v501 = vshll.u32 %v456, 16
        %v503 = vor.u32 %v500, %v501
        %v504 = vsel %vm460, %v492, %v503
        %v506 = vshrl.u32 %v457, 16
        %v508 = vrot.slane %v506, 7
        %v509 = vshll.u32 %v457, 16
        %v511 = vor.u32 %v508, %v509
        %v512 = vsel %vm460, %v500, %v511
        %v514 = vshrl.u32 %v458, 16
        %v516 = vrot.slane %v514, 7
        %v517 = vshll.u32 %v458, 16
        %v519 = vor.u32 %v516, %v517
        %v520 = vsel %vm460, %v508, %v519
        %v522 = vshrl.u32 %v459, 16
        %v524 = vrot.slane %v522, 7
        %v525 = vshll.u32 %v459, 16
        %v527 = vor.u32 %v524, %v525
        %v528 = vsel %vm460, %v516, %v527
        %537 = vst [vmem:[#allocation3] sm:$0xff] %v472
        %538 = vst [vmem:[#allocation3 + $0x48] sm:$0xff] %v480
        %539 = vst [vmem:[#allocation3 + $0x90] sm:$0xff] %v488
        %540 = vst [vmem:[#allocation3 + $0xd8] sm:$0xff] %v496
        %541 = vst [vmem:[#allocation3 + $0x120] sm:$0xff] %v504
        %542 = vst [vmem:[#allocation3 + $0x168] sm:$0xff] %v512
        %543 = vst [vmem:[#allocation3 + $0x1b0] sm:$0xff] %v520
        %544 = vst [vmem:[#allocation3 + $0x1f8] sm:$0xff] %v528
        %v545 = vld [vmem:[#allocation2 + $0x8] sm:$0xff]
        %v546 = vld [vmem:[#allocation2 + $0x10] sm:$0xff]
        %v547 = vld [vmem:[#allocation2 + $0x18] sm:$0xff]
        %v548 = vld [vmem:[#allocation2 + $0x20] sm:$0xff]
        %v549 = vld [vmem:[#allocation2 + $0x28] sm:$0xff]
        %v550 = vld [vmem:[#allocation2 + $0x30] sm:$0xff]
        %v551 = vld [vmem:[#allocation2 + $0x38] sm:$0xff]
        %v552 = vld [vmem:[#allocation2 + $0x40] sm:$0xff]
        %553 = vst [vmem:[#allocation3 + $0x8] sm:$0xff] %v545
        %554 = vst [vmem:[#allocation3 + $0x50] sm:$0xff] %v546
        %555 = vst [vmem:[#allocation3 + $0x98] sm:$0xff] %v547
        %556 = vst [vmem:[#allocation3 + $0xe0] sm:$0xff] %v548
        %557 = vst [vmem:[#allocation3 + $0x128] sm:$0xff] %v549
        %558 = vst [vmem:[#allocation3 + $0x170] sm:$0xff] %v550
        %559 = vst [vmem:[#allocation3 + $0x1b8] sm:$0xff] %v551
        %560 = vst [vmem:[#allocation3 + $0x200] sm:$0xff] %v552
        %v561 = vld [vmem:[#allocation2 + $0x8] sm:$0xff]
        %v562 = vld [vmem:[#allocation2 + $0x10] sm:$0xff]
        %v563 = vld [vmem:[#allocation2 + $0x18] sm:$0xff]
        %v564 = vld [vmem:[#allocation2 + $0x20] sm:$0xff]
        %v565 = vld [vmem:[#allocation2 + $0x28] sm:$0xff]
        %v566 = vld [vmem:[#allocation2 + $0x30] sm:$0xff]
        %v567 = vld [vmem:[#allocation2 + $0x38] sm:$0xff]
        %v568 = vld [vmem:[#allocation2 + $0x40] sm:$0xff]
        %v569 = vld [vmem:[#allocation2 + $0x48] sm:$0x1]
        %vm570 = vsmask.f32 7424
        %v572 = vshrl.u32 %v561, 16
        %v574 = vshll.u32 %v561, 16
        %v576 = vrot.slane %v574, 1
        %v577 = vor.u32 %v572, %v576
        %v579 = vshll.u32 %v562, 16
        %v581 = vrot.slane %v579, 1
        %v582 = vsel %vm570, %v577, %v581
        %v583 = vshrl.u32 %v562, 16
        %v585 = vor.u32 %v583, %v581
        %v587 = vshll.u32 %v563, 16
        %v589 = vrot.slane %v587, 1
        %v590 = vsel %vm570, %v585, %v589
        %v591 = vshrl.u32 %v563, 16
        %v593 = vor.u32 %v591, %v589
        %v595 = vshll.u32 %v564, 16
        %v597 = vrot.slane %v595, 1
        %v598 = vsel %vm570, %v593, %v597
        %v599 = vshrl.u32 %v564, 16
        %v601 = vor.u32 %v599, %v597
        %v603 = vshll.u32 %v565, 16
        %v605 = vrot.slane %v603, 1
        %v606 = vsel %vm570, %v601, %v605
        %v607 = vshrl.u32 %v565, 16
        %v609 = vor.u32 %v607, %v605
        %v611 = vshll.u32 %v566, 16
        %v613 = vrot.slane %v611, 1
        %v614 = vsel %vm570, %v609, %v613
        %v615 = vshrl.u32 %v566, 16
        %v617 = vor.u32 %v615, %v613
        %v619 = vshll.u32 %v567, 16
        %v621 = vrot.slane %v619, 1
        %v622 = vsel %vm570, %v617, %v621
        %v623 = vshrl.u32 %v567, 16
        %v625 = vor.u32 %v623, %v621
        %v627 = vshll.u32 %v568, 16
        %v629 = vrot.slane %v627, 1
        %v630 = vsel %vm570, %v625, %v629
        %v631 = vshrl.u32 %v568, 16
        %v633 = vor.u32 %v631, %v629
        %v635 = vshll.u32 %v569, 16
        %v637 = vrot.slane %v635, 1
        %v638 = vsel %vm570, %v633, %v637
        %647 = vst [vmem:[#allocation3 + $0x10] sm:$0xff] %v582
        %648 = vst [vmem:[#allocation3 + $0x58] sm:$0xff] %v590
        %649 = vst [vmem:[#allocation3 + $0xa0] sm:$0xff] %v598
        %650 = vst [vmem:[#allocation3 + $0xe8] sm:$0xff] %v606
        %651 = vst [vmem:[#allocation3 + $0x130] sm:$0xff] %v614
        %652 = vst [vmem:[#allocation3 + $0x178] sm:$0xff] %v622
        %653 = vst [vmem:[#allocation3 + $0x1c0] sm:$0xff] %v630
        %654 = vst [vmem:[#allocation3 + $0x208] sm:$0xff] %v638
        %v655 = vld [vmem:[#allocation2 + $0x8] sm:$0x80]
        %v656 = vld [vmem:[#allocation2 + $0x10] sm:$0xff]
        %v657 = vld [vmem:[#allocation2 + $0x18] sm:$0xff]
        %v658 = vld [vmem:[#allocation2 + $0x20] sm:$0xff]
        %v659 = vld [vmem:[#allocation2 + $0x28] sm:$0xff]
        %v660 = vld [vmem:[#allocation2 + $0x30] sm:$0xff]
        %v661 = vld [vmem:[#allocation2 + $0x38] sm:$0xff]
        %v662 = vld [vmem:[#allocation2 + $0x40] sm:$0xff]
        %v663 = vld [vmem:[#allocation2 + $0x48] sm:$0xff]
        %v665 = vshrl.u32 %v655, 16
        %v667 = vrot.slane %v665, 7
        %v669 = vshrl.u32 %v656, 16
        %v671 = vrot.slane %v669, 7
        %v672 = vshll.u32 %v656, 16
        %v674 = vor.u32 %v671, %v672
        %v675 = vsel %vm460, %v667, %v674
        %v677 = vshrl.u32 %v657, 16
        %v679 = vrot.slane %v677, 7
        %v680 = vshll.u32 %v657, 16
        %v682 = vor.u32 %v679, %v680
        %v683 = vsel %vm460, %v671, %v682
        %v685 = vshrl.u32 %v658, 16
        %v687 = vrot.slane %v685, 7
        %v688 = vshll.u32 %v658, 16
        %v690 = vor.u32 %v687, %v688
        %v691 = vsel %vm460, %v679, %v690
        %v693 = vshrl.u32 %v659, 16
        %v695 = vrot.slane %v693, 7
        %v696 = vshll.u32 %v659, 16
        %v698 = vor.u32 %v695, %v696
        %v699 = vsel %vm460, %v687, %v698
        %v701 = vshrl.u32 %v660, 16
        %v703 = vrot.slane %v701, 7
        %v704 = vshll.u32 %v660, 16
        %v706 = vor.u32 %v703, %v704
        %v707 = vsel %vm460, %v695, %v706
        %v709 = vshrl.u32 %v661, 16
        %v711 = vrot.slane %v709, 7
        %v712 = vshll.u32 %v661, 16
        %v714 = vor.u32 %v711, %v712
        %v715 = vsel %vm460, %v703, %v714
        %v717 = vshrl.u32 %v662, 16
        %v719 = vrot.slane %v717, 7
        %v720 = vshll.u32 %v662, 16
        %v722 = vor.u32 %v719, %v720
        %v723 = vsel %vm460, %v711, %v722
        %v725 = vshrl.u32 %v663, 16
        %v727 = vrot.slane %v725, 7
        %v728 = vshll.u32 %v663, 16
        %v730 = vor.u32 %v727, %v728
        %v731 = vsel %vm460, %v719, %v730
        %740 = vst [vmem:[#allocation3 + $0x18] sm:$0xff] %v675
        %741 = vst [vmem:[#allocation3 + $0x60] sm:$0xff] %v683
        %742 = vst [vmem:[#allocation3 + $0xa8] sm:$0xff] %v691
        %743 = vst [vmem:[#allocation3 + $0xf0] sm:$0xff] %v699
        %744 = vst [vmem:[#allocation3 + $0x138] sm:$0xff] %v707
        %745 = vst [vmem:[#allocation3 + $0x180] sm:$0xff] %v715
        %746 = vst [vmem:[#allocation3 + $0x1c8] sm:$0xff] %v723
        %747 = vst [vmem:[#allocation3 + $0x210] sm:$0xff] %v731
        %v748 = vld [vmem:[#allocation2 + $0x10] sm:$0xff]
        %v749 = vld [vmem:[#allocation2 + $0x18] sm:$0xff]
        %v750 = vld [vmem:[#allocation2 + $0x20] sm:$0xff]
        %v751 = vld [vmem:[#allocation2 + $0x28] sm:$0xff]
        %v752 = vld [vmem:[#allocation2 + $0x30] sm:$0xff]
        %v753 = vld [vmem:[#allocation2 + $0x38] sm:$0xff]
        %v754 = vld [vmem:[#allocation2 + $0x40] sm:$0xff]
        %v755 = vld [vmem:[#allocation2 + $0x48] sm:$0xff]
        %756 = vst [vmem:[#allocation3 + $0x20] sm:$0xff] %v748
        %757 = vst [vmem:[#allocation3 + $0x68] sm:$0xff] %v749
        %758 = vst [vmem:[#allocation3 + $0xb0] sm:$0xff] %v750
        %759 = vst [vmem:[#allocation3 + $0xf8] sm:$0xff] %v751
        %760 = vst [vmem:[#allocation3 + $0x140] sm:$0xff] %v752
        %761 = vst [vmem:[#allocation3 + $0x188] sm:$0xff] %v753
        %762 = vst [vmem:[#allocation3 + $0x1d0] sm:$0xff] %v754
        %763 = vst [vmem:[#allocation3 + $0x218] sm:$0xff] %v755
        %v764 = vld [vmem:[#allocation2 + $0x10] sm:$0xff]
        %v765 = vld [vmem:[#allocation2 + $0x18] sm:$0xff]
        %v766 = vld [vmem:[#allocation2 + $0x20] sm:$0xff]
        %v767 = vld [vmem:[#allocation2 + $0x28] sm:$0xff]
        %v768 = vld [vmem:[#allocation2 + $0x30] sm:$0xff]
        %v769 = vld [vmem:[#allocation2 + $0x38] sm:$0xff]
        %v770 = vld [vmem:[#allocation2 + $0x40] sm:$0xff]
        %v771 = vld [vmem:[#allocation2 + $0x48] sm:$0xff]
        %v772 = vld [vmem:[#allocation2 + $0x50] sm:$0x1]
        %v774 = vshrl.u32 %v764, 16
        %v776 = vshll.u32 %v764, 16
        %v778 = vrot.slane %v776, 1
        %v779 = vor.u32 %v774, %v778
        %v781 = vshll.u32 %v765, 16
        %v783 = vrot.slane %v781, 1
        %v784 = vsel %vm570, %v779, %v783
        %v785 = vshrl.u32 %v765, 16
        %v787 = vor.u32 %v785, %v783
        %v789 = vshll.u32 %v766, 16
        %v791 = vrot.slane %v789, 1
        %v792 = vsel %vm570, %v787, %v791
        %v793 = vshrl.u32 %v766, 16
        %v795 = vor.u32 %v793, %v791
        %v797 = vshll.u32 %v767, 16
        %v799 = vrot.slane %v797, 1
        %v800 = vsel %vm570, %v795, %v799
        %v801 = vshrl.u32 %v767, 16
        %v803 = vor.u32 %v801, %v799
        %v805 = vshll.u32 %v768, 16
        %v807 = vrot.slane %v805, 1
        %v808 = vsel %vm570, %v803, %v807
        %v809 = vshrl.u32 %v768, 16
        %v811 = vor.u32 %v809, %v807
        %v813 = vshll.u32 %v769, 16
        %v815 = vrot.slane %v813, 1
        %v816 = vsel %vm570, %v811, %v815
        %v817 = vshrl.u32 %v769, 16
        %v819 = vor.u32 %v817, %v815
        %v821 = vshll.u32 %v770, 16
        %v823 = vrot.slane %v821, 1
        %v824 = vsel %vm570, %v819, %v823
        %v825 = vshrl.u32 %v770, 16
        %v827 = vor.u32 %v825, %v823
        %v829 = vshll.u32 %v771, 16
        %v831 = vrot.slane %v829, 1
        %v832 = vsel %vm570, %v827, %v831
        %v833 = vshrl.u32 %v771, 16
        %v835 = vor.u32 %v833, %v831
        %v837 = vshll.u32 %v772, 16
        %v839 = vrot.slane %v837, 1
        %v840 = vsel %vm570, %v835, %v839
        %849 = vst [vmem:[#allocation3 + $0x28] sm:$0xff] %v784
        %850 = vst [vmem:[#allocation3 + $0x70] sm:$0xff] %v792
        %851 = vst [vmem:[#allocation3 + $0xb8] sm:$0xff] %v800
        %852 = vst [vmem:[#allocation3 + $0x100] sm:$0xff] %v808
        %853 = vst [vmem:[#allocation3 + $0x148] sm:$0xff] %v816
        %854 = vst [vmem:[#allocation3 + $0x190] sm:$0xff] %v824
        %855 = vst [vmem:[#allocation3 + $0x1d8] sm:$0xff] %v832
        %856 = vst [vmem:[#allocation3 + $0x220] sm:$0xff] %v840
        %v857 = vld [vmem:[#allocation2 + $0x10] sm:$0x80]
        %v858 = vld [vmem:[#allocation2 + $0x18] sm:$0xff]
        %v859 = vld [vmem:[#allocation2 + $0x20] sm:$0xff]
        %v860 = vld [vmem:[#allocation2 + $0x28] sm:$0xff]
        %v861 = vld [vmem:[#allocation2 + $0x30] sm:$0xff]
        %v862 = vld [vmem:[#allocation2 + $0x38] sm:$0xff]
        %v863 = vld [vmem:[#allocation2 + $0x40] sm:$0xff]
        %v864 = vld [vmem:[#allocation2 + $0x48] sm:$0xff]
        %v865 = vld [vmem:[#allocation2 + $0x50] sm:$0xff]
        %v867 = vshrl.u32 %v857, 16
        %v869 = vrot.slane %v867, 7
        %v871 = vshrl.u32 %v858, 16
        %v873 = vrot.slane %v871, 7
        %v874 = vshll.u32 %v858, 16
        %v876 = vor.u32 %v873, %v874
        %v877 = vsel %vm460, %v869, %v876
        %v879 = vshrl.u32 %v859, 16
        %v881 = vrot.slane %v879, 7
        %v882 = vshll.u32 %v859, 16
        %v884 = vor.u32 %v881, %v882
        %v885 = vsel %vm460, %v873, %v884
        %v887 = vshrl.u32 %v860, 16
        %v889 = vrot.slane %v887, 7
        %v890 = vshll.u32 %v860, 16
        %v892 = vor.u32 %v889, %v890
        %v893 = vsel %vm460, %v881, %v892
        %v895 = vshrl.u32 %v861, 16
        %v897 = vrot.slane %v895, 7
        %v898 = vshll.u32 %v861, 16
        %v900 = vor.u32 %v897, %v898
        %v901 = vsel %vm460, %v889, %v900
        %v903 = vshrl.u32 %v862, 16
        %v905 = vrot.slane %v903, 7
        %v906 = vshll.u32 %v862, 16
        %v908 = vor.u32 %v905, %v906
        %v909 = vsel %vm460, %v897, %v908
        %v911 = vshrl.u32 %v863, 16
        %v913 = vrot.slane %v911, 7
        %v914 = vshll.u32 %v863, 16
        %v916 = vor.u32 %v913, %v914
        %v917 = vsel %vm460, %v905, %v916
        %v919 = vshrl.u32 %v864, 16
        %v921 = vrot.slane %v919, 7
        %v922 = vshll.u32 %v864, 16
        %v924 = vor.u32 %v921, %v922
        %v925 = vsel %vm460, %v913, %v924
        %v927 = vshrl.u32 %v865, 16
        %v929 = vrot.slane %v927, 7
        %v930 = vshll.u32 %v865, 16
        %v932 = vor.u32 %v929, %v930
        %v933 = vsel %vm460, %v921, %v932
        %942 = vst [vmem:[#allocation3 + $0x30] sm:$0xff] %v877
        %943 = vst [vmem:[#allocation3 + $0x78] sm:$0xff] %v885
        %944 = vst [vmem:[#allocation3 + $0xc0] sm:$0xff] %v893
        %945 = vst [vmem:[#allocation3 + $0x108] sm:$0xff] %v901
        %946 = vst [vmem:[#allocation3 + $0x150] sm:$0xff] %v909
        %947 = vst [vmem:[#allocation3 + $0x198] sm:$0xff] %v917
        %948 = vst [vmem:[#allocation3 + $0x1e0] sm:$0xff] %v925
        %949 = vst [vmem:[#allocation3 + $0x228] sm:$0xff] %v933
        %v950 = vld [vmem:[#allocation2 + $0x18] sm:$0xff]
        %v951 = vld [vmem:[#allocation2 + $0x20] sm:$0xff]
        %v952 = vld [vmem:[#allocation2 + $0x28] sm:$0xff]
        %v953 = vld [vmem:[#allocation2 + $0x30] sm:$0xff]
        %v954 = vld [vmem:[#allocation2 + $0x38] sm:$0xff]
        %v955 = vld [vmem:[#allocation2 + $0x40] sm:$0xff]
        %v956 = vld [vmem:[#allocation2 + $0x48] sm:$0xff]
        %v957 = vld [vmem:[#allocation2 + $0x50] sm:$0xff]
        %958 = vst [vmem:[#allocation3 + $0x38] sm:$0xff] %v950
        %959 = vst [vmem:[#allocation3 + $0x80] sm:$0xff] %v951
        %960 = vst [vmem:[#allocation3 + $0xc8] sm:$0xff] %v952
        %961 = vst [vmem:[#allocation3 + $0x110] sm:$0xff] %v953
        %962 = vst [vmem:[#allocation3 + $0x158] sm:$0xff] %v954
        %963 = vst [vmem:[#allocation3 + $0x1a0] sm:$0xff] %v955
        %964 = vst [vmem:[#allocation3 + $0x1e8] sm:$0xff] %v956
        %965 = vst [vmem:[#allocation3 + $0x230] sm:$0xff] %v957
        %v966 = vld [vmem:[#allocation2 + $0x18] sm:$0xff]
        %v967 = vld [vmem:[#allocation2 + $0x20] sm:$0xff]
        %v968 = vld [vmem:[#allocation2 + $0x28] sm:$0xff]
        %v969 = vld [vmem:[#allocation2 + $0x30] sm:$0xff]
        %v970 = vld [vmem:[#allocation2 + $0x38] sm:$0xff]
        %v971 = vld [vmem:[#allocation2 + $0x40] sm:$0xff]
        %v972 = vld [vmem:[#allocation2 + $0x48] sm:$0xff]
        %v973 = vld [vmem:[#allocation2 + $0x50] sm:$0xff]
        %v974 = vld [vmem:[#allocation2 + $0x58] sm:$0x1]
        %v976 = vshrl.u32 %v966, 16
        %v978 = vshll.u32 %v966, 16
        %v980 = vrot.slane %v978, 1
        %v981 = vor.u32 %v976, %v980
        %v983 = vshll.u32 %v967, 16
        %v985 = vrot.slane %v983, 1
        %v986 = vsel %vm570, %v981, %v985
        %v987 = vshrl.u32 %v967, 16
        %v989 = vor.u32 %v987, %v985
        %v991 = vshll.u32 %v968, 16
        %v993 = vrot.slane %v991, 1
        %v994 = vsel %vm570, %v989, %v993
        %v995 = vshrl.u32 %v968, 16
        %v997 = vor.u32 %v995, %v993
        %v999 = vshll.u32 %v969, 16
        %v1001 = vrot.slane %v999, 1
        %v1002 = vsel %vm570, %v997, %v1001
        %v1003 = vshrl.u32 %v969, 16
        %v1005 = vor.u32 %v1003, %v1001
        %v1007 = vshll.u32 %v970, 16
        %v1009 = vrot.slane %v1007, 1
        %v1010 = vsel %vm570, %v1005, %v1009
        %v1011 = vshrl.u32 %v970, 16
        %v1013 = vor.u32 %v1011, %v1009
        %v1015 = vshll.u32 %v971, 16
        %v1017 = vrot.slane %v1015, 1
        %v1018 = vsel %vm570, %v1013, %v1017
        %v1019 = vshrl.u32 %v971, 16
        %v1021 = vor.u32 %v1019, %v1017
        %v1023 = vshll.u32 %v972, 16
        %v1025 = vrot.slane %v1023, 1
        %v1026 = vsel %vm570, %v1021, %v1025
        %v1027 = vshrl.u32 %v972, 16
        %v1029 = vor.u32 %v1027, %v1025
        %v1031 = vshll.u32 %v973, 16
        %v1033 = vrot.slane %v1031, 1
        %v1034 = vsel %vm570, %v1029, %v1033
        %v1035 = vshrl.u32 %v973, 16
        %v1037 = vor.u32 %v1035, %v1033
        %v1039 = vshll.u32 %v974, 16
        %v1041 = vrot.slane %v1039, 1
        %v1042 = vsel %vm570, %v1037, %v1041
        %1051 = vst [vmem:[#allocation3 + $0x40] sm:$0xff] %v986
        %1052 = vst [vmem:[#allocation3 + $0x88] sm:$0xff] %v994
        %1053 = vst [vmem:[#allocation3 + $0xd0] sm:$0xff] %v1002
        %1054 = vst [vmem:[#allocation3 + $0x118] sm:$0xff] %v1010
        %1055 = vst [vmem:[#allocation3 + $0x160] sm:$0xff] %v1018
        %1056 = vst [vmem:[#allocation3 + $0x1a8] sm:$0xff] %v1026
        %1057 = vst [vmem:[#allocation3 + $0x1f0] sm:$0xff] %v1034
        %1058 = vst [vmem:[#allocation3 + $0x238] sm:$0xff] %v1042
        %v1059 = vld [vmem:[#allocation3] sm:$0xff]
        %v1060 = vld [vmem:[#allocation3 + $0x8] sm:$0xff]
        %v1061 = vld [vmem:[#allocation3 + $0x10] sm:$0xff]
        %v1062 = vld [vmem:[#allocation3 + $0x18] sm:$0xff]
        %v1063 = vld [vmem:[#allocation3 + $0x20] sm:$0xff]
        %v1064 = vld [vmem:[#allocation3 + $0x28] sm:$0xff]
        %v1065 = vld [vmem:[#allocation3 + $0x30] sm:$0xff]
        %v1066 = vld [vmem:[#allocation3 + $0x38] sm:$0xff]
        %v1067 = vld [vmem:[#allocation3 + $0x40] sm:$0xff]
        %v1068 = vld [vmem:[#allocation3 + $0x48] sm:$0xff]
        %v1069 = vld [vmem:[#allocation3 + $0x50] sm:$0xff]
        %v1070 = vld [vmem:[#allocation3 + $0x58] sm:$0xff]
        %v1071 = vld [vmem:[#allocation3 + $0x60] sm:$0xff]
        %v1072 = vld [vmem:[#allocation3 + $0x68] sm:$0xff]
        %v1073 = vld [vmem:[#allocation3 + $0x70] sm:$0xff]
        %v1074 = vld [vmem:[#allocation3 + $0x78] sm:$0xff]
        %v1075 = vld [vmem:[#allocation3 + $0x80] sm:$0xff]
        %v1076 = vld [vmem:[#allocation3 + $0x88] sm:$0xff]
        %v1077 = vld [vmem:[#allocation3 + $0x90] sm:$0xff]
        %v1078 = vld [vmem:[#allocation3 + $0x98] sm:$0xff]
        %v1079 = vld [vmem:[#allocation3 + $0xa0] sm:$0xff]
        %v1080 = vld [vmem:[#allocation3 + $0xa8] sm:$0xff]
        %v1081 = vld [vmem:[#allocation3 + $0xb0] sm:$0xff]
        %v1082 = vld [vmem:[#allocation3 + $0xb8] sm:$0xff]
        %v1083 = vld [vmem:[#allocation3 + $0xc0] sm:$0xff]
        %v1084 = vld [vmem:[#allocation3 + $0xc8] sm:$0xff]
        %v1085 = vld [vmem:[#allocation3 + $0xd0] sm:$0xff]
        %v1086 = vld [vmem:[#allocation3 + $0xd8] sm:$0xff]
        %v1087 = vld [vmem:[#allocation3 + $0xe0] sm:$0xff]
        %v1088 = vld [vmem:[#allocation3 + $0xe8] sm:$0xff]
        %v1089 = vld [vmem:[#allocation3 + $0xf0] sm:$0xff]
        %v1090 = vld [vmem:[#allocation3 + $0xf8] sm:$0xff]
        %v1091 = vld [vmem:[#allocation3 + $0x100] sm:$0xff]
        %v1092 = vld [vmem:[#allocation3 + $0x108] sm:$0xff]
        %v1093 = vld [vmem:[#allocation3 + $0x110] sm:$0xff]
        %v1094 = vld [vmem:[#allocation3 + $0x118] sm:$0xff]
        %v1095 = vld [vmem:[#allocation3 + $0x120] sm:$0xff]
        %v1096 = vld [vmem:[#allocation3 + $0x128] sm:$0xff]
        %v1097 = vld [vmem:[#allocation3 + $0x130] sm:$0xff]
        %v1098 = vld [vmem:[#allocation3 + $0x138] sm:$0xff]
        %v1099 = vld [vmem:[#allocation3 + $0x140] sm:$0xff]
        %v1100 = vld [vmem:[#allocation3 + $0x148] sm:$0xff]
        %v1101 = vld [vmem:[#allocation3 + $0x150] sm:$0xff]
        %v1102 = vld [vmem:[#allocation3 + $0x158] sm:$0xff]
        %v1103 = vld [vmem:[#allocation3 + $0x160] sm:$0xff]
        %v1104 = vld [vmem:[#allocation3 + $0x168] sm:$0xff]
        %v1105 = vld [vmem:[#allocation3 + $0x170] sm:$0xff]
        %v1106 = vld [vmem:[#allocation3 + $0x178] sm:$0xff]
        %v1107 = vld [vmem:[#allocation3 + $0x180] sm:$0xff]
        %v1108 = vld [vmem:[#allocation3 + $0x188] sm:$0xff]
        %v1109 = vld [vmem:[#allocation3 + $0x190] sm:$0xff]
        %v1110 = vld [vmem:[#allocation3 + $0x198] sm:$0xff]
        %v1111 = vld [vmem:[#allocation3 + $0x1a0] sm:$0xff]
        %v1112 = vld [vmem:[#allocation3 + $0x1a8] sm:$0xff]
        %v1113 = vld [vmem:[#allocation3 + $0x1b0] sm:$0xff]
        %v1114 = vld [vmem:[#allocation3 + $0x1b8] sm:$0xff]
        %v1115 = vld [vmem:[#allocation3 + $0x1c0] sm:$0xff]
        %v1116 = vld [vmem:[#allocation3 + $0x1c8] sm:$0xff]
        %v1117 = vld [vmem:[#allocation3 + $0x1d0] sm:$0xff]
        %v1118 = vld [vmem:[#allocation3 + $0x1d8] sm:$0xff]
        %v1119 = vld [vmem:[#allocation3 + $0x1e0] sm:$0xff]
        %v1120 = vld [vmem:[#allocation3 + $0x1e8] sm:$0xff]
        %v1121 = vld [vmem:[#allocation3 + $0x1f0] sm:$0xff]
        %v1122 = vld [vmem:[#allocation3 + $0x1f8] sm:$0xff]
        %v1123 = vld [vmem:[#allocation3 + $0x200] sm:$0xff]
        %v1124 = vld [vmem:[#allocation3 + $0x208] sm:$0xff]
        %v1125 = vld [vmem:[#allocation3 + $0x210] sm:$0xff]
        %v1126 = vld [vmem:[#allocation3 + $0x218] sm:$0xff]
        %v1127 = vld [vmem:[#allocation3 + $0x220] sm:$0xff]
        %v1128 = vld [vmem:[#allocation3 + $0x228] sm:$0xff]
        %v1129 = vld [vmem:[#allocation3 + $0x230] sm:$0xff]
        %v1130 = vld [vmem:[#allocation3 + $0x238] sm:$0xff]
        %v1131 = vld [vmem:[%s3] sm:$0xf]
        %v1132 = vld [vmem:[%s3 + $0x4] sm:$0xf]
        %v1133 = vld [vmem:[%s3 + $0x8] sm:$0xf]
        %v1134 = vld [vmem:[%s3 + $0xc] sm:$0xf]
        %v1135 = vld [vmem:[%s3 + $0x10] sm:$0xf]
        %v1136 = vld [vmem:[%s3 + $0x14] sm:$0xf]
        %v1137 = vld [vmem:[%s3 + $0x18] sm:$0xf]
        %v1138 = vld [vmem:[%s3 + $0x1c] sm:$0xf]
        %v1139 = vld [vmem:[%s3 + $0x20] sm:$0xf]
        %v1140 = vld [vmem:[%s3 + $0x24] sm:$0xf]
        %v1141 = vld [vmem:[%s3 + $0x28] sm:$0xf]
        %v1142 = vld [vmem:[%s3 + $0x2c] sm:$0xf]
        %v1143 = vld [vmem:[%s3 + $0x30] sm:$0xf]
        %v1144 = vld [vmem:[%s3 + $0x34] sm:$0xf]
        %v1145 = vld [vmem:[%s3 + $0x38] sm:$0xf]
        %v1146 = vld [vmem:[%s3 + $0x3c] sm:$0xf]
        %v1147 = vld [vmem:[%s3 + $0x40] sm:$0xf]
        %v1148 = vld [vmem:[%s3 + $0x44] sm:$0xf]
        %v1149 = vld [vmem:[%s3 + $0x48] sm:$0xf]
        %v1150 = vld [vmem:[%s3 + $0x4c] sm:$0xf]
        %v1151 = vld [vmem:[%s3 + $0x50] sm:$0xf]
        %v1152 = vld [vmem:[%s3 + $0x54] sm:$0xf]
        %v1153 = vld [vmem:[%s3 + $0x58] sm:$0xf]
        %v1154 = vld [vmem:[%s3 + $0x5c] sm:$0xf]
        %v1155 = vld [vmem:[%s3 + $0x60] sm:$0xf]
        %v1156 = vld [vmem:[%s3 + $0x64] sm:$0xf]
        %v1157 = vld [vmem:[%s3 + $0x68] sm:$0xf]
        %v1158 = vld [vmem:[%s3 + $0x6c] sm:$0xf]
        %v1159 = vld [vmem:[%s3 + $0x70] sm:$0xf]
        %v1160 = vld [vmem:[%s3 + $0x74] sm:$0xf]
        %v1161 = vld [vmem:[%s3 + $0x78] sm:$0xf]
        %v1162 = vld [vmem:[%s3 + $0x7c] sm:$0xf]
        %v1163 = vld [vmem:[%s3 + $0x80] sm:$0xf]
        %v1164 = vld [vmem:[%s3 + $0x84] sm:$0xf]
        %v1165 = vld [vmem:[%s3 + $0x88] sm:$0xf]
        %v1166 = vld [vmem:[%s3 + $0x8c] sm:$0xf]
        %v1167 = vld [vmem:[%s3 + $0x90] sm:$0xf]
        %v1168 = vld [vmem:[%s3 + $0x94] sm:$0xf]
        %v1169 = vld [vmem:[%s3 + $0x98] sm:$0xf]
        %v1170 = vld [vmem:[%s3 + $0x9c] sm:$0xf]
        %v1171 = vld [vmem:[%s3 + $0xa0] sm:$0xf]
        %v1172 = vld [vmem:[%s3 + $0xa4] sm:$0xf]
        %v1173 = vld [vmem:[%s3 + $0xa8] sm:$0xf]
        %v1174 = vld [vmem:[%s3 + $0xac] sm:$0xf]
        %v1175 = vld [vmem:[%s3 + $0xb0] sm:$0xf]
        %v1176 = vld [vmem:[%s3 + $0xb4] sm:$0xf]
        %v1177 = vld [vmem:[%s3 + $0xb8] sm:$0xf]
        %v1178 = vld [vmem:[%s3 + $0xbc] sm:$0xf]
        %v1179 = vld [vmem:[%s3 + $0xc0] sm:$0xf]
        %v1180 = vld [vmem:[%s3 + $0xc4] sm:$0xf]
        %v1181 = vld [vmem:[%s3 + $0xc8] sm:$0xf]
        %v1182 = vld [vmem:[%s3 + $0xcc] sm:$0xf]
        %v1183 = vld [vmem:[%s3 + $0xd0] sm:$0xf]
        %v1184 = vld [vmem:[%s3 + $0xd4] sm:$0xf]
        %v1185 = vld [vmem:[%s3 + $0xd8] sm:$0xf]
        %v1186 = vld [vmem:[%s3 + $0xdc] sm:$0xf]
        %v1187 = vld [vmem:[%s3 + $0xe0] sm:$0xf]
        %v1188 = vld [vmem:[%s3 + $0xe4] sm:$0xf]
        %v1189 = vld [vmem:[%s3 + $0xe8] sm:$0xf]
        %v1190 = vld [vmem:[%s3 + $0xec] sm:$0xf]
        %v1191 = vld [vmem:[%s3 + $0xf0] sm:$0xf]
        %v1192 = vld [vmem:[%s3 + $0xf4] sm:$0xf]
        %v1193 = vld [vmem:[%s3 + $0xf8] sm:$0xf]
        %v1194 = vld [vmem:[%s3 + $0xfc] sm:$0xf]
        %v1195 = vld [vmem:[%s3 + $0x100] sm:$0xf]
        %v1196 = vld [vmem:[%s3 + $0x104] sm:$0xf]
        %v1197 = vld [vmem:[%s3 + $0x108] sm:$0xf]
        %v1198 = vld [vmem:[%s3 + $0x10c] sm:$0xf]
        %v1199 = vld [vmem:[%s3 + $0x110] sm:$0xf]
        %v1200 = vld [vmem:[%s3 + $0x114] sm:$0xf]
        %v1201 = vld [vmem:[%s3 + $0x118] sm:$0xf]
        %v1202 = vld [vmem:[%s3 + $0x11c] sm:$0xf]
        %v1203 = vld [vmem:[%s3 + $0x120] sm:$0xf]
        %v1204 = vld [vmem:[%s3 + $0x124] sm:$0xf]
        %v1205 = vld [vmem:[%s3 + $0x128] sm:$0xf]
        %v1206 = vld [vmem:[%s3 + $0x12c] sm:$0xf]
        %v1207 = vld [vmem:[%s3 + $0x130] sm:$0xf]
        %v1208 = vld [vmem:[%s3 + $0x134] sm:$0xf]
        %v1209 = vld [vmem:[%s3 + $0x138] sm:$0xf]
        %v1210 = vld [vmem:[%s3 + $0x13c] sm:$0xf]
        %v1211 = vld [vmem:[%s3 + $0x140] sm:$0xf]
        %v1212 = vld [vmem:[%s3 + $0x144] sm:$0xf]
        %v1213 = vld [vmem:[%s3 + $0x148] sm:$0xf]
        %v1214 = vld [vmem:[%s3 + $0x14c] sm:$0xf]
        %v1215 = vld [vmem:[%s3 + $0x150] sm:$0xf]
        %v1216 = vld [vmem:[%s3 + $0x154] sm:$0xf]
        %v1217 = vld [vmem:[%s3 + $0x158] sm:$0xf]
        %v1218 = vld [vmem:[%s3 + $0x15c] sm:$0xf]
        %v1219 = vld [vmem:[%s3 + $0x160] sm:$0xf]
        %v1220 = vld [vmem:[%s3 + $0x164] sm:$0xf]
        %v1221 = vld [vmem:[%s3 + $0x168] sm:$0xf]
        %v1222 = vld [vmem:[%s3 + $0x16c] sm:$0xf]
        %v1223 = vld [vmem:[%s3 + $0x170] sm:$0xf]
        %v1224 = vld [vmem:[%s3 + $0x174] sm:$0xf]
        %v1225 = vld [vmem:[%s3 + $0x178] sm:$0xf]
        %v1226 = vld [vmem:[%s3 + $0x17c] sm:$0xf]
        %v1227 = vld [vmem:[%s3 + $0x180] sm:$0xf]
        %v1228 = vld [vmem:[%s3 + $0x184] sm:$0xf]
        %v1229 = vld [vmem:[%s3 + $0x188] sm:$0xf]
        %v1230 = vld [vmem:[%s3 + $0x18c] sm:$0xf]
        %v1231 = vld [vmem:[%s3 + $0x190] sm:$0xf]
        %v1232 = vld [vmem:[%s3 + $0x194] sm:$0xf]
        %v1233 = vld [vmem:[%s3 + $0x198] sm:$0xf]
        %v1234 = vld [vmem:[%s3 + $0x19c] sm:$0xf]
        %v1235 = vld [vmem:[%s3 + $0x1a0] sm:$0xf]
        %v1236 = vld [vmem:[%s3 + $0x1a4] sm:$0xf]
        %v1237 = vld [vmem:[%s3 + $0x1a8] sm:$0xf]
        %v1238 = vld [vmem:[%s3 + $0x1ac] sm:$0xf]
        %v1239 = vld [vmem:[%s3 + $0x1b0] sm:$0xf]
        %v1240 = vld [vmem:[%s3 + $0x1b4] sm:$0xf]
        %v1241 = vld [vmem:[%s3 + $0x1b8] sm:$0xf]
        %v1242 = vld [vmem:[%s3 + $0x1bc] sm:$0xf]
        %v1243 = vld [vmem:[%s3 + $0x1c0] sm:$0xf]
        %v1244 = vld [vmem:[%s3 + $0x1c4] sm:$0xf]
        %v1245 = vld [vmem:[%s3 + $0x1c8] sm:$0xf]
        %v1246 = vld [vmem:[%s3 + $0x1cc] sm:$0xf]
        %v1247 = vld [vmem:[%s3 + $0x1d0] sm:$0xf]
        %v1248 = vld [vmem:[%s3 + $0x1d4] sm:$0xf]
        %v1249 = vld [vmem:[%s3 + $0x1d8] sm:$0xf]
        %v1250 = vld [vmem:[%s3 + $0x1dc] sm:$0xf]
        %v1251 = vld [vmem:[%s3 + $0x1e0] sm:$0xf]
        %v1252 = vld [vmem:[%s3 + $0x1e4] sm:$0xf]
        %v1253 = vld [vmem:[%s3 + $0x1e8] sm:$0xf]
        %v1254 = vld [vmem:[%s3 + $0x1ec] sm:$0xf]
        %v1255 = vld [vmem:[%s3 + $0x1f0] sm:$0xf]
        %v1256 = vld [vmem:[%s3 + $0x1f4] sm:$0xf]
        %v1257 = vld [vmem:[%s3 + $0x1f8] sm:$0xf]
        %v1258 = vld [vmem:[%s3 + $0x1fc] sm:$0xf]
        %v1259 = vld [vmem:[%s3 + $0x200] sm:$0xf]
        %v1260 = vld [vmem:[%s3 + $0x204] sm:$0xf]
        %v1261 = vld [vmem:[%s3 + $0x208] sm:$0xf]
        %v1262 = vld [vmem:[%s3 + $0x20c] sm:$0xf]
        %v1263 = vld [vmem:[%s3 + $0x210] sm:$0xf]
        %v1264 = vld [vmem:[%s3 + $0x214] sm:$0xf]
        %v1265 = vld [vmem:[%s3 + $0x218] sm:$0xf]
        %v1266 = vld [vmem:[%s3 + $0x21c] sm:$0xf]
        %v1267 = vld [vmem:[%s3 + $0x220] sm:$0xf]
        %v1268 = vld [vmem:[%s3 + $0x224] sm:$0xf]
        %v1269 = vld [vmem:[%s3 + $0x228] sm:$0xf]
        %v1270 = vld [vmem:[%s3 + $0x22c] sm:$0xf]
        %v1271 = vld [vmem:[%s3 + $0x230] sm:$0xf]
        %v1272 = vld [vmem:[%s3 + $0x234] sm:$0xf]
        %v1273 = vld [vmem:[%s3 + $0x238] sm:$0xf]
        %v1274 = vld [vmem:[%s3 + $0x23c] sm:$0xf]
        %v1275 = vld [vmem:[%s4] sm:$0x1]
        %v1277 = vlaneseq
        %v1278 = vshrl.u32 %v1277, 7
        %v1279 = vsub.s32 0, %v1278
        %v1280 = vrot.slane %v1275, %v1279
        %v1426 = vunpack.c.l.b16 %v1131
        %v1427 = vunpack.c.l.b16 %v1132
        %v1428 = vunpack.c.l.b16 %v1133
        %v1429 = vunpack.c.l.b16 %v1134
        %v1430 = vunpack.c.l.b16 %v1135
        %v1431 = vunpack.c.l.b16 %v1136
        %v1432 = vunpack.c.l.b16 %v1137
        %v1433 = vunpack.c.l.b16 %v1138
        %v1434 = vunpack.c.l.b16 %v1139
        %v1435 = vunpack.c.l.b16 %v1140
        %v1436 = vunpack.c.l.b16 %v1141
        %v1437 = vunpack.c.l.b16 %v1142
        %v1438 = vunpack.c.l.b16 %v1143
        %v1439 = vunpack.c.l.b16 %v1144
        %v1440 = vunpack.c.l.b16 %v1145
        %v1441 = vunpack.c.l.b16 %v1146
        %v1442 = vunpack.c.l.b16 %v1147
        %v1443 = vunpack.c.l.b16 %v1148
        %v1444 = vunpack.c.l.b16 %v1149
        %v1445 = vunpack.c.l.b16 %v1150
        %v1446 = vunpack.c.l.b16 %v1151
        %v1447 = vunpack.c.l.b16 %v1152
        %v1448 = vunpack.c.l.b16 %v1153
        %v1449 = vunpack.c.l.b16 %v1154
        %v1450 = vunpack.c.l.b16 %v1155
        %v1451 = vunpack.c.l.b16 %v1156
        %v1452 = vunpack.c.l.b16 %v1157
        %v1453 = vunpack.c.l.b16 %v1158
        %v1454 = vunpack.c.l.b16 %v1159
        %v1455 = vunpack.c.l.b16 %v1160
        %v1456 = vunpack.c.l.b16 %v1161
        %v1457 = vunpack.c.l.b16 %v1162
        %v1458 = vunpack.c.l.b16 %v1163
        %v1459 = vunpack.c.l.b16 %v1164
        %v1460 = vunpack.c.l.b16 %v1165
        %v1461 = vunpack.c.l.b16 %v1166
        %v1462 = vunpack.c.l.b16 %v1167
        %v1463 = vunpack.c.l.b16 %v1168
        %v1464 = vunpack.c.l.b16 %v1169
        %v1465 = vunpack.c.l.b16 %v1170
        %v1466 = vunpack.c.l.b16 %v1171
        %v1467 = vunpack.c.l.b16 %v1172
        %v1468 = vunpack.c.l.b16 %v1173
        %v1469 = vunpack.c.l.b16 %v1174
        %v1470 = vunpack.c.l.b16 %v1175
        %v1471 = vunpack.c.l.b16 %v1176
        %v1472 = vunpack.c.l.b16 %v1177
        %v1473 = vunpack.c.l.b16 %v1178
        %v1474 = vunpack.c.l.b16 %v1179
        %v1475 = vunpack.c.l.b16 %v1180
        %v1476 = vunpack.c.l.b16 %v1181
        %v1477 = vunpack.c.l.b16 %v1182
        %v1478 = vunpack.c.l.b16 %v1183
        %v1479 = vunpack.c.l.b16 %v1184
        %v1480 = vunpack.c.l.b16 %v1185
        %v1481 = vunpack.c.l.b16 %v1186
        %v1482 = vunpack.c.l.b16 %v1187
        %v1483 = vunpack.c.l.b16 %v1188
        %v1484 = vunpack.c.l.b16 %v1189
        %v1485 = vunpack.c.l.b16 %v1190
        %v1486 = vunpack.c.l.b16 %v1191
        %v1487 = vunpack.c.l.b16 %v1192
        %v1488 = vunpack.c.l.b16 %v1193
        %v1489 = vunpack.c.l.b16 %v1194
        %v1490 = vunpack.c.l.b16 %v1195
        %v1491 = vunpack.c.l.b16 %v1196
        %v1492 = vunpack.c.l.b16 %v1197
        %v1493 = vunpack.c.l.b16 %v1198
        %v1494 = vunpack.c.l.b16 %v1199
        %v1495 = vunpack.c.l.b16 %v1200
        %v1496 = vunpack.c.l.b16 %v1201
        %v1497 = vunpack.c.l.b16 %v1202
        %v1498 = vunpack.c.l.b16 %v1203
        %v1499 = vunpack.c.l.b16 %v1204
        %v1500 = vunpack.c.l.b16 %v1205
        %v1501 = vunpack.c.l.b16 %v1206
        %v1502 = vunpack.c.l.b16 %v1207
        %v1503 = vunpack.c.l.b16 %v1208
        %v1504 = vunpack.c.l.b16 %v1209
        %v1505 = vunpack.c.l.b16 %v1210
        %v1506 = vunpack.c.l.b16 %v1211
        %v1507 = vunpack.c.l.b16 %v1212
        %v1508 = vunpack.c.l.b16 %v1213
        %v1509 = vunpack.c.l.b16 %v1214
        %v1510 = vunpack.c.l.b16 %v1215
        %v1511 = vunpack.c.l.b16 %v1216
        %v1512 = vunpack.c.l.b16 %v1217
        %v1513 = vunpack.c.l.b16 %v1218
        %v1514 = vunpack.c.l.b16 %v1219
        %v1515 = vunpack.c.l.b16 %v1220
        %v1516 = vunpack.c.l.b16 %v1221
        %v1517 = vunpack.c.l.b16 %v1222
        %v1518 = vunpack.c.l.b16 %v1223
        %v1519 = vunpack.c.l.b16 %v1224
        %v1520 = vunpack.c.l.b16 %v1225
        %v1521 = vunpack.c.l.b16 %v1226
        %v1522 = vunpack.c.l.b16 %v1227
        %v1523 = vunpack.c.l.b16 %v1228
        %v1524 = vunpack.c.l.b16 %v1229
        %v1525 = vunpack.c.l.b16 %v1230
        %v1526 = vunpack.c.l.b16 %v1231
        %v1527 = vunpack.c.l.b16 %v1232
        %v1528 = vunpack.c.l.b16 %v1233
        %v1529 = vunpack.c.l.b16 %v1234
        %v1530 = vunpack.c.l.b16 %v1235
        %v1531 = vunpack.c.l.b16 %v1236
        %v1532 = vunpack.c.l.b16 %v1237
        %v1533 = vunpack.c.l.b16 %v1238
        %v1534 = vunpack.c.l.b16 %v1239
        %v1535 = vunpack.c.l.b16 %v1240
        %v1536 = vunpack.c.l.b16 %v1241
        %v1537 = vunpack.c.l.b16 %v1242
        %v1538 = vunpack.c.l.b16 %v1243
        %v1539 = vunpack.c.l.b16 %v1244
        %v1540 = vunpack.c.l.b16 %v1245
        %v1541 = vunpack.c.l.b16 %v1246
        %v1542 = vunpack.c.l.b16 %v1247
        %v1543 = vunpack.c.l.b16 %v1248
        %v1544 = vunpack.c.l.b16 %v1249
        %v1545 = vunpack.c.l.b16 %v1250
        %v1546 = vunpack.c.l.b16 %v1251
        %v1547 = vunpack.c.l.b16 %v1252
        %v1548 = vunpack.c.l.b16 %v1253
        %v1549 = vunpack.c.l.b16 %v1254
        %v1550 = vunpack.c.l.b16 %v1255
        %v1551 = vunpack.c.l.b16 %v1256
        %v1552 = vunpack.c.l.b16 %v1257
        %v1553 = vunpack.c.l.b16 %v1258
        %v1554 = vunpack.c.l.b16 %v1259
        %v1555 = vunpack.c.l.b16 %v1260
        %v1556 = vunpack.c.l.b16 %v1261
        %v1557 = vunpack.c.l.b16 %v1262
        %v1558 = vunpack.c.l.b16 %v1263
        %v1559 = vunpack.c.l.b16 %v1264
        %v1560 = vunpack.c.l.b16 %v1265
        %v1561 = vunpack.c.l.b16 %v1266
        %v1562 = vunpack.c.l.b16 %v1267
        %v1563 = vunpack.c.l.b16 %v1268
        %v1564 = vunpack.c.l.b16 %v1269
        %v1565 = vunpack.c.l.b16 %v1270
        %v1566 = vunpack.c.l.b16 %v1271
        %v1567 = vunpack.c.l.b16 %v1272
        %v1568 = vunpack.c.l.b16 %v1273
        %v1569 = vunpack.c.l.b16 %v1274
        %v1570 = vpack.c.b16 %v1427, %v1426
        %v1571 = vpack.c.b16 %v1429, %v1428
        %v1572 = vpack.c.b16 %v1431, %v1430
        %v1573 = vpack.c.b16 %v1433, %v1432
        %v1574 = vpack.c.b16 %v1435, %v1434
        %v1575 = vpack.c.b16 %v1437, %v1436
        %v1576 = vpack.c.b16 %v1439, %v1438
        %v1577 = vpack.c.b16 %v1441, %v1440
        %v1578 = vpack.c.b16 %v1443, %v1442
        %v1579 = vpack.c.b16 %v1445, %v1444
        %v1580 = vpack.c.b16 %v1447, %v1446
        %v1581 = vpack.c.b16 %v1449, %v1448
        %v1582 = vpack.c.b16 %v1451, %v1450
        %v1583 = vpack.c.b16 %v1453, %v1452
        %v1584 = vpack.c.b16 %v1455, %v1454
        %v1585 = vpack.c.b16 %v1457, %v1456
        %v1586 = vpack.c.b16 %v1459, %v1458
        %v1587 = vpack.c.b16 %v1461, %v1460
        %v1588 = vpack.c.b16 %v1463, %v1462
        %v1589 = vpack.c.b16 %v1465, %v1464
        %v1590 = vpack.c.b16 %v1467, %v1466
        %v1591 = vpack.c.b16 %v1469, %v1468
        %v1592 = vpack.c.b16 %v1471, %v1470
        %v1593 = vpack.c.b16 %v1473, %v1472
        %v1594 = vpack.c.b16 %v1475, %v1474
        %v1595 = vpack.c.b16 %v1477, %v1476
        %v1596 = vpack.c.b16 %v1479, %v1478
        %v1597 = vpack.c.b16 %v1481, %v1480
        %v1598 = vpack.c.b16 %v1483, %v1482
        %v1599 = vpack.c.b16 %v1485, %v1484
        %v1600 = vpack.c.b16 %v1487, %v1486
        %v1601 = vpack.c.b16 %v1489, %v1488
        %v1602 = vpack.c.b16 %v1491, %v1490
        %v1603 = vpack.c.b16 %v1493, %v1492
        %v1604 = vpack.c.b16 %v1495, %v1494
        %v1605 = vpack.c.b16 %v1497, %v1496
        %v1606 = vpack.c.b16 %v1499, %v1498
        %v1607 = vpack.c.b16 %v1501, %v1500
        %v1608 = vpack.c.b16 %v1503, %v1502
        %v1609 = vpack.c.b16 %v1505, %v1504
        %v1610 = vpack.c.b16 %v1507, %v1506
        %v1611 = vpack.c.b16 %v1509, %v1508
        %v1612 = vpack.c.b16 %v1511, %v1510
        %v1613 = vpack.c.b16 %v1513, %v1512
        %v1614 = vpack.c.b16 %v1515, %v1514
        %v1615 = vpack.c.b16 %v1517, %v1516
        %v1616 = vpack.c.b16 %v1519, %v1518
        %v1617 = vpack.c.b16 %v1521, %v1520
        %v1618 = vpack.c.b16 %v1523, %v1522
        %v1619 = vpack.c.b16 %v1525, %v1524
        %v1620 = vpack.c.b16 %v1527, %v1526
        %v1621 = vpack.c.b16 %v1529, %v1528
        %v1622 = vpack.c.b16 %v1531, %v1530
        %v1623 = vpack.c.b16 %v1533, %v1532
        %v1624 = vpack.c.b16 %v1535, %v1534
        %v1625 = vpack.c.b16 %v1537, %v1536
        %v1626 = vpack.c.b16 %v1539, %v1538
        %v1627 = vpack.c.b16 %v1541, %v1540
        %v1628 = vpack.c.b16 %v1543, %v1542
        %v1629 = vpack.c.b16 %v1545, %v1544
        %v1630 = vpack.c.b16 %v1547, %v1546
        %v1631 = vpack.c.b16 %v1549, %v1548
        %v1632 = vpack.c.b16 %v1551, %v1550
        %v1633 = vpack.c.b16 %v1553, %v1552
        %v1634 = vpack.c.b16 %v1555, %v1554
        %v1635 = vpack.c.b16 %v1557, %v1556
        %v1636 = vpack.c.b16 %v1559, %v1558
        %v1637 = vpack.c.b16 %v1561, %v1560
        %v1638 = vpack.c.b16 %v1563, %v1562
        %v1639 = vpack.c.b16 %v1565, %v1564
        %v1640 = vpack.c.b16 %v1567, %v1566
        %v1641 = vpack.c.b16 %v1569, %v1568
        %1714 = vmatprep.subr.bf16.mxu0 0
        %1715 = vmatpush1.bf16.msra.mxu0 %v1570
        %1716 = vmatprep.subr.bf16.mxu0 0
        %1717 = vmatpush1.bf16.msra.mxu0 %v1571
        %1718 = vmatprep.subr.bf16.mxu0 0
        %1719 = vmatpush1.bf16.msra.mxu0 %v1572
        %1720 = vmatprep.subr.bf16.mxu0 0
        %1721 = vmatpush1.bf16.msra.mxu0 %v1573
        %1722 = vmatprep.subr.bf16.mxu0 0
        %1723 = vmatpush1.bf16.msra.mxu0 %v1574
        %1724 = vmatprep.subr.bf16.mxu0 0
        %1725 = vmatpush1.bf16.msra.mxu0 %v1575
        %1726 = vmatprep.subr.bf16.mxu0 0
        %1727 = vmatpush1.bf16.msra.mxu0 %v1576
        %1728 = vmatprep.subr.bf16.mxu0 0
        %1729 = vmatpush1.bf16.msra.mxu0 %v1577
        %1730 = vmatprep.subr.bf16.mxu0 0
        %1731 = vmatpush1.bf16.msra.mxu0 %v1578
        %1732 = vmatprep.subr.bf16.mxu0 0
        %1733 = vmatpush1.bf16.msra.mxu0 %v1579
        %1734 = vmatprep.subr.bf16.mxu0 0
        %1735 = vmatpush1.bf16.msra.mxu0 %v1580
        %1736 = vmatprep.subr.bf16.mxu0 0
        %1737 = vmatpush1.bf16.msra.mxu0 %v1581
        %1738 = vmatprep.subr.bf16.mxu0 0
        %1739 = vmatpush1.bf16.msra.mxu0 %v1582
        %1740 = vmatprep.subr.bf16.mxu0 0
        %1741 = vmatpush1.bf16.msra.mxu0 %v1583
        %1742 = vmatprep.subr.bf16.mxu0 0
        %1743 = vmatpush1.bf16.msra.mxu0 %v1584
        %1744 = vmatprep.subr.bf16.mxu0 0
        %1745 = vmatpush1.bf16.msra.mxu0 %v1585
        %1746 = vmatprep.mubr.bf16.mxu0 %v1060
        %1747 = vmatmul.mubr.bf16.gmra.mrb[0].mxu0 %v1059
        %v1748 = vpop.f32.mrb[0].mxu0
        %v1749 = vadd.f32 %v1280, %v1748
        %v1750 = vpop.f32.mrb[0].mxu0
        %v1751 = vpop.f32.mrb[0].mxu0
        %v1752 = vpop.f32.mrb[0].mxu0
        %1753 = vmatprep.mubr.bf16.mxu0 %v1069
        %1754 = vmatmul.mubr.bf16.gmra.mrb[0].mxu0 %v1068
        %v1755 = vpop.f32.mrb[0].mxu0
        %v1756 = vadd.f32 %v1280, %v1755
        %v1757 = vpop.f32.mrb[0].mxu0
        %v1758 = vpop.f32.mrb[0].mxu0
        %v1759 = vpop.f32.mrb[0].mxu0
        %1760 = vmatprep.mubr.bf16.mxu0 %v1078
        %1761 = vmatmul.mubr.bf16.gmra.mrb[0].mxu0 %v1077
        %v1762 = vpop.f32.mrb[0].mxu0
        %v1763 = vadd.f32 %v1280, %v1762
        %v1764 = vpop.f32.mrb[0].mxu0
        %v1765 = vpop.f32.mrb[0].mxu0
        %v1766 = vpop.f32.mrb[0].mxu0
        %1767 = vmatprep.mubr.bf16.mxu0 %v1087
        %1768 = vmatmul.mubr.bf16.gmra.mrb[0].mxu0 %v1086
        %v1769 = vpop.f32.mrb[0].mxu0
        %v1770 = vadd.f32 %v1280, %v1769
        %v1771 = vpop.f32.mrb[0].mxu0
        %v1772 = vpop.f32.mrb[0].mxu0
        %v1773 = vpop.f32.mrb[0].mxu0
        %1774 = vmatprep.mubr.bf16.mxu0 %v1096
        %1775 = vmatmul.mubr.bf16.gmra.mrb[0].mxu0 %v1095
        %v1776 = vpop.f32.mrb[0].mxu0
        %v1777 = vadd.f32 %v1280, %v1776
        %v1778 = vpop.f32.mrb[0].mxu0
        %v1779 = vpop.f32.mrb[0].mxu0
        %v1780 = vpop.f32.mrb[0].mxu0
        %1781 = vmatprep.mubr.bf16.mxu0 %v1105
        %1782 = vmatmul.mubr.bf16.gmra.mrb[0].mxu0 %v1104
        %v1783 = vpop.f32.mrb[0].mxu0
        %v1784 = vadd.f32 %v1280, %v1783
        %v1785 = vpop.f32.mrb[0].mxu0
        %v1786 = vpop.f32.mrb[0].mxu0
        %v1787 = vpop.f32.mrb[0].mxu0
        %1788 = vmatprep.mubr.bf16.mxu0 %v1114
        %1789 = vmatmul.mubr.bf16.gmra.mrb[0].mxu0 %v1113
        %v1790 = vpop.f32.mrb[0].mxu0
        %v1791 = vadd.f32 %v1280, %v1790
        %v1792 = vpop.f32.mrb[0].mxu0
        %v1793 = vpop.f32.mrb[0].mxu0
        %v1794 = vpop.f32.mrb[0].mxu0
        %1795 = vmatprep.mubr.bf16.mxu0 %v1123
        %1796 = vmatmul.mubr.bf16.gmra.mrb[0].mxu0 %v1122
        %v1797 = vpop.f32.mrb[0].mxu0
        %v1798 = vadd.f32 %v1280, %v1797
        %v1799 = vpop.f32.mrb[0].mxu0
        %v1800 = vpop.f32.mrb[0].mxu0
        %v1801 = vpop.f32.mrb[0].mxu0
        %1802 = vdwg.mxu0
        %1803 = vmatprep.subr.bf16.mxu0 0
        %1804 = vmatpush1.bf16.msra.mxu0 %v1586
        %1805 = vmatprep.subr.bf16.mxu0 0
        %1806 = vmatpush1.bf16.msra.mxu0 %v1587
        %1807 = vmatprep.subr.bf16.mxu0 0
        %1808 = vmatpush1.bf16.msra.mxu0 %v1588
        %1809 = vmatprep.subr.bf16.mxu0 0
        %1810 = vmatpush1.bf16.msra.mxu0 %v1589
        %1811 = vmatprep.subr.bf16.mxu0 0
        %1812 = vmatpush1.bf16.msra.mxu0 %v1590
        %1813 = vmatprep.subr.bf16.mxu0 0
        %1814 = vmatpush1.bf16.msra.mxu0 %v1591
        %1815 = vmatprep.subr.bf16.mxu0 0
        %1816 = vmatpush1.bf16.msra.mxu0 %v1592
        %1817 = vmatprep.subr.bf16.mxu0 0
        %1818 = vmatpush1.bf16.msra.mxu0 %v1593
        %1819 = vmatprep.subr.bf16.mxu0 0
        %1820 = vmatpush1.bf16.msra.mxu0 %v1594
        %1821 = vmatprep.subr.bf16.mxu0 0
        %1822 = vmatpush1.bf16.msra.mxu0 %v1595
        %1823 = vmatprep.subr.bf16.mxu0 0
        %1824 = vmatpush1.bf16.msra.mxu0 %v1596
        %1825 = vmatprep.subr.bf16.mxu0 0
        %1826 = vmatpush1.bf16.msra.mxu0 %v1597
        %1827 = vmatprep.subr.bf16.mxu0 0
        %1828 = vmatpush1.bf16.msra.mxu0 %v1598
        %1829 = vmatprep.subr.bf16.mxu0 0
        %1830 = vmatpush1.bf16.msra.mxu0 %v1599
        %1831 = vmatprep.subr.bf16.mxu0 0
        %1832 = vmatpush1.bf16.msra.mxu0 %v1600
        %1833 = vmatprep.subr.bf16.mxu0 0
        %1834 = vmatpush1.bf16.msra.mxu0 %v1601
        %1835 = vmatprep.mubr.bf16.mxu0 %v1062
        %1836 = vmatmul.mubr.bf16.gmra.mrb[0].mxu0 %v1061
        %v1837 = vpop.f32.mrb[0].mxu0
        %v1838 = vadd.f32 %v1749, %v1837
        %v1839 = vpop.f32.mrb[0].mxu0
        %v1840 = vpop.f32.mrb[0].mxu0
        %v1841 = vpop.f32.mrb[0].mxu0
        %1842 = vmatprep.mubr.bf16.mxu0 %v1071
        %1843 = vmatmul.mubr.bf16.gmra.mrb[0].mxu0 %v1070
        %v1844 = vpop.f32.mrb[0].mxu0
        %v1845 = vadd.f32 %v1756, %v1844
        %v1846 = vpop.f32.mrb[0].mxu0
        %v1847 = vpop.f32.mrb[0].mxu0
        %v1848 = vpop.f32.mrb[0].mxu0
        %1849 = vmatprep.mubr.bf16.mxu0 %v1080
        %1850 = vmatmul.mubr.bf16.gmra.mrb[0].mxu0 %v1079
        %v1851 = vpop.f32.mrb[0].mxu0
        %v1852 = vadd.f32 %v1763, %v1851
        %v1853 = vpop.f32.mrb[0].mxu0
        %v1854 = vpop.f32.mrb[0].mxu0
        %v1855 = vpop.f32.mrb[0].mxu0
        %1856 = vmatprep.mubr.bf16.mxu0 %v1089
        %1857 = vmatmul.mubr.bf16.gmra.mrb[0].mxu0 %v1088
        %v1858 = vpop.f32.mrb[0].mxu0
        %v1859 = vadd.f32 %v1770, %v1858
        %v1860 = vpop.f32.mrb[0].mxu0
        %v1861 = vpop.f32.mrb[0].mxu0
        %v1862 = vpop.f32.mrb[0].mxu0
        %1863 = vmatprep.mubr.bf16.mxu0 %v1098
        %1864 = vmatmul.mubr.bf16.gmra.mrb[0].mxu0 %v1097
        %v1865 = vpop.f32.mrb[0].mxu0
        %v1866 = vadd.f32 %v1777, %v1865
        %v1867 = vpop.f32.mrb[0].mxu0
        %v1868 = vpop.f32.mrb[0].mxu0
        %v1869 = vpop.f32.mrb[0].mxu0
        %1870 = vmatprep.mubr.bf16.mxu0 %v1107
        %1871 = vmatmul.mubr.bf16.gmra.mrb[0].mxu0 %v1106
        %v1872 = vpop.f32.mrb[0].mxu0
        %v1873 = vadd.f32 %v1784, %v1872
        %v1874 = vpop.f32.mrb[0].mxu0
        %v1875 = vpop.f32.mrb[0].mxu0
        %v1876 = vpop.f32.mrb[0].mxu0
        %1877 = vmatprep.mubr.bf16.mxu0 %v1116
        %1878 = vmatmul.mubr.bf16.gmra.mrb[0].mxu0 %v1115
        %v1879 = vpop.f32.mrb[0].mxu0
        %v1880 = vadd.f32 %v1791, %v1879
        %v1881 = vpop.f32.mrb[0].mxu0
        %v1882 = vpop.f32.mrb[0].mxu0
        %v1883 = vpop.f32.mrb[0].mxu0
        %1884 = vmatprep.mubr.bf16.mxu0 %v1125
        %1885 = vmatmul.mubr.bf16.gmra.mrb[0].mxu0 %v1124
        %v1886 = vpop.f32.mrb[0].mxu0
        %v1887 = vadd.f32 %v1798, %v1886
        %v1888 = vpop.f32.mrb[0].mxu0
        %v1889 = vpop.f32.mrb[0].mxu0
        %v1890 = vpop.f32.mrb[0].mxu0
        %1891 = vdwg.mxu0
        %1892 = vmatprep.subr.bf16.mxu0 0
        %1893 = vmatpush1.bf16.msra.mxu0 %v1602
        %1894 = vmatprep.subr.bf16.mxu0 0
        %1895 = vmatpush1.bf16.msra.mxu0 %v1603
        %1896 = vmatprep.subr.bf16.mxu0 0
        %1897 = vmatpush1.bf16.msra.mxu0 %v1604
        %1898 = vmatprep.subr.bf16.mxu0 0
        %1899 = vmatpush1.bf16.msra.mxu0 %v1605
        %1900 = vmatprep.subr.bf16.mxu0 0
        %1901 = vmatpush1.bf16.msra.mxu0 %v1606
        %1902 = vmatprep.subr.bf16.mxu0 0
        %1903 = vmatpush1.bf16.msra.mxu0 %v1607
        %1904 = vmatprep.subr.bf16.mxu0 0
        %1905 = vmatpush1.bf16.msra.mxu0 %v1608
        %1906 = vmatprep.subr.bf16.mxu0 0
        %1907 = vmatpush1.bf16.msra.mxu0 %v1609
        %1908 = vmatprep.subr.bf16.mxu0 0
        %1909 = vmatpush1.bf16.msra.mxu0 %v1610
        %1910 = vmatprep.subr.bf16.mxu0 0
        %1911 = vmatpush1.bf16.msra.mxu0 %v1611
        %1912 = vmatprep.subr.bf16.mxu0 0
        %1913 = vmatpush1.bf16.msra.mxu0 %v1612
        %1914 = vmatprep.subr.bf16.mxu0 0
        %1915 = vmatpush1.bf16.msra.mxu0 %v1613
        %1916 = vmatprep.subr.bf16.mxu0 0
        %1917 = vmatpush1.bf16.msra.mxu0 %v1614
        %1918 = vmatprep.subr.bf16.mxu0 0
        %1919 = vmatpush1.bf16.msra.mxu0 %v1615
        %1920 = vmatprep.subr.bf16.mxu0 0
        %1921 = vmatpush1.bf16.msra.mxu0 %v1616
        %1922 = vmatprep.subr.bf16.mxu0 0
        %1923 = vmatpush1.bf16.msra.mxu0 %v1617
        %1924 = vmatprep.mubr.bf16.mxu0 %v1064
        %1925 = vmatmul.mubr.bf16.gmra.mrb[0].mxu0 %v1063
        %v1926 = vpop.f32.mrb[0].mxu0
        %v1927 = vadd.f32 %v1838, %v1926
        %v1928 = vpop.f32.mrb[0].mxu0
        %v1929 = vpop.f32.mrb[0].mxu0
        %v1930 = vpop.f32.mrb[0].mxu0
        %1931 = vmatprep.mubr.bf16.mxu0 %v1073
        %1932 = vmatmul.mubr.bf16.gmra.mrb[0].mxu0 %v1072
        %v1933 = vpop.f32.mrb[0].mxu0
        %v1934 = vadd.f32 %v1845, %v1933
        %v1935 = vpop.f32.mrb[0].mxu0
        %v1936 = vpop.f32.mrb[0].mxu0
        %v1937 = vpop.f32.mrb[0].mxu0
        %1938 = vmatprep.mubr.bf16.mxu0 %v1082
        %1939 = vmatmul.mubr.bf16.gmra.mrb[0].mxu0 %v1081
        %v1940 = vpop.f32.mrb[0].mxu0
        %v1941 = vadd.f32 %v1852, %v1940
        %v1942 = vpop.f32.mrb[0].mxu0
        %v1943 = vpop.f32.mrb[0].mxu0
        %v1944 = vpop.f32.mrb[0].mxu0
        %1945 = vmatprep.mubr.bf16.mxu0 %v1091
        %1946 = vmatmul.mubr.bf16.gmra.mrb[0].mxu0 %v1090
        %v1947 = vpop.f32.mrb[0].mxu0
        %v1948 = vadd.f32 %v1859, %v1947
        %v1949 = vpop.f32.mrb[0].mxu0
        %v1950 = vpop.f32.mrb[0].mxu0
        %v1951 = vpop.f32.mrb[0].mxu0
        %1952 = vmatprep.mubr.bf16.mxu0 %v1100
        %1953 = vmatmul.mubr.bf16.gmra.mrb[0].mxu0 %v1099
        %v1954 = vpop.f32.mrb[0].mxu0
        %v1955 = vadd.f32 %v1866, %v1954
        %v1956 = vpop.f32.mrb[0].mxu0
        %v1957 = vpop.f32.mrb[0].mxu0
        %v1958 = vpop.f32.mrb[0].mxu0
        %1959 = vmatprep.mubr.bf16.mxu0 %v1109
        %1960 = vmatmul.mubr.bf16.gmra.mrb[0].mxu0 %v1108
        %v1961 = vpop.f32.mrb[0].mxu0
        %v1962 = vadd.f32 %v1873, %v1961
        %v1963 = vpop.f32.mrb[0].mxu0
        %v1964 = vpop.f32.mrb[0].mxu0
        %v1965 = vpop.f32.mrb[0].mxu0
        %1966 = vmatprep.mubr.bf16.mxu0 %v1118
        %1967 = vmatmul.mubr.bf16.gmra.mrb[0].mxu0 %v1117
        %v1968 = vpop.f32.mrb[0].mxu0
        %v1969 = vadd.f32 %v1880, %v1968
        %v1970 = vpop.f32.mrb[0].mxu0
        %v1971 = vpop.f32.mrb[0].mxu0
        %v1972 = vpop.f32.mrb[0].mxu0
        %1973 = vmatprep.mubr.bf16.mxu0 %v1127
        %1974 = vmatmul.mubr.bf16.gmra.mrb[0].mxu0 %v1126
        %v1975 = vpop.f32.mrb[0].mxu0
        %v1976 = vadd.f32 %v1887, %v1975
        %v1977 = vpop.f32.mrb[0].mxu0
        %v1978 = vpop.f32.mrb[0].mxu0
        %v1979 = vpop.f32.mrb[0].mxu0
        %1980 = vdwg.mxu0
        %1981 = vmatprep.subr.bf16.mxu0 0
        %1982 = vmatpush1.bf16.msra.mxu0 %v1618
        %1983 = vmatprep.subr.bf16.mxu0 0
        %1984 = vmatpush1.bf16.msra.mxu0 %v1619
        %1985 = vmatprep.subr.bf16.mxu0 0
        %1986 = vmatpush1.bf16.msra.mxu0 %v1620
        %1987 = vmatprep.subr.bf16.mxu0 0
        %1988 = vmatpush1.bf16.msra.mxu0 %v1621
        %1989 = vmatprep.subr.bf16.mxu0 0
        %1990 = vmatpush1.bf16.msra.mxu0 %v1622
        %1991 = vmatprep.subr.bf16.mxu0 0
        %1992 = vmatpush1.bf16.msra.mxu0 %v1623
        %1993 = vmatprep.subr.bf16.mxu0 0
        %1994 = vmatpush1.bf16.msra.mxu0 %v1624
        %1995 = vmatprep.subr.bf16.mxu0 0
        %1996 = vmatpush1.bf16.msra.mxu0 %v1625
        %1997 = vmatprep.subr.bf16.mxu0 0
        %1998 = vmatpush1.bf16.msra.mxu0 %v1626
        %1999 = vmatprep.subr.bf16.mxu0 0
        %2000 = vmatpush1.bf16.msra.mxu0 %v1627
        %2001 = vmatprep.subr.bf16.mxu0 0
        %2002 = vmatpush1.bf16.msra.mxu0 %v1628
        %2003 = vmatprep.subr.bf16.mxu0 0
        %2004 = vmatpush1.bf16.msra.mxu0 %v1629
        %2005 = vmatprep.subr.bf16.mxu0 0
        %2006 = vmatpush1.bf16.msra.mxu0 %v1630
        %2007 = vmatprep.subr.bf16.mxu0 0
        %2008 = vmatpush1.bf16.msra.mxu0 %v1631
        %2009 = vmatprep.subr.bf16.mxu0 0
        %2010 = vmatpush1.bf16.msra.mxu0 %v1632
        %2011 = vmatprep.subr.bf16.mxu0 0
        %2012 = vmatpush1.bf16.msra.mxu0 %v1633
        %2013 = vmatprep.mubr.bf16.mxu0 %v1066
        %2014 = vmatmul.mubr.bf16.gmra.mrb[0].mxu0 %v1065
        %v2015 = vpop.f32.mrb[0].mxu0
        %v2016 = vadd.f32 %v1927, %v2015
        %v2017 = vpop.f32.mrb[0].mxu0
        %v2018 = vpop.f32.mrb[0].mxu0
        %v2019 = vpop.f32.mrb[0].mxu0
        %2020 = vmatprep.mubr.bf16.mxu0 %v1075
        %2021 = vmatmul.mubr.bf16.gmra.mrb[0].mxu0 %v1074
        %v2022 = vpop.f32.mrb[0].mxu0
        %v2023 = vadd.f32 %v1934, %v2022
        %v2024 = vpop.f32.mrb[0].mxu0
        %v2025 = vpop.f32.mrb[0].mxu0
        %v2026 = vpop.f32.mrb[0].mxu0
        %2027 = vmatprep.mubr.bf16.mxu0 %v1084
        %2028 = vmatmul.mubr.bf16.gmra.mrb[0].mxu0 %v1083
        %v2029 = vpop.f32.mrb[0].mxu0
        %v2030 = vadd.f32 %v1941, %v2029
        %v2031 = vpop.f32.mrb[0].mxu0
        %v2032 = vpop.f32.mrb[0].mxu0
        %v2033 = vpop.f32.mrb[0].mxu0
        %2034 = vmatprep.mubr.bf16.mxu0 %v1093
        %2035 = vmatmul.mubr.bf16.gmra.mrb[0].mxu0 %v1092
        %v2036 = vpop.f32.mrb[0].mxu0
        %v2037 = vadd.f32 %v1948, %v2036
        %v2038 = vpop.f32.mrb[0].mxu0
        %v2039 = vpop.f32.mrb[0].mxu0
        %v2040 = vpop.f32.mrb[0].mxu0
        %2041 = vmatprep.mubr.bf16.mxu0 %v1102
        %2042 = vmatmul.mubr.bf16.gmra.mrb[0].mxu0 %v1101
        %v2043 = vpop.f32.mrb[0].mxu0
        %v2044 = vadd.f32 %v1955, %v2043
        %v2045 = vpop.f32.mrb[0].mxu0
        %v2046 = vpop.f32.mrb[0].mxu0
        %v2047 = vpop.f32.mrb[0].mxu0
        %2048 = vmatprep.mubr.bf16.mxu0 %v1111
        %2049 = vmatmul.mubr.bf16.gmra.mrb[0].mxu0 %v1110
        %v2050 = vpop.f32.mrb[0].mxu0
        %v2051 = vadd.f32 %v1962, %v2050
        %v2052 = vpop.f32.mrb[0].mxu0
        %v2053 = vpop.f32.mrb[0].mxu0
        %v2054 = vpop.f32.mrb[0].mxu0
        %2055 = vmatprep.mubr.bf16.mxu0 %v1120
        %2056 = vmatmul.mubr.bf16.gmra.mrb[0].mxu0 %v1119
        %v2057 = vpop.f32.mrb[0].mxu0
        %v2058 = vadd.f32 %v1969, %v2057
        %v2059 = vpop.f32.mrb[0].mxu0
        %v2060 = vpop.f32.mrb[0].mxu0
        %v2061 = vpop.f32.mrb[0].mxu0
        %2062 = vmatprep.mubr.bf16.mxu0 %v1129
        %2063 = vmatmul.mubr.bf16.gmra.mrb[0].mxu0 %v1128
        %v2064 = vpop.f32.mrb[0].mxu0
        %v2065 = vadd.f32 %v1976, %v2064
        %v2066 = vpop.f32.mrb[0].mxu0
        %v2067 = vpop.f32.mrb[0].mxu0
        %v2068 = vpop.f32.mrb[0].mxu0
        %2069 = vdwg.mxu0
        %2070 = vmatprep.subr.bf16.mxu0 0
        %2071 = vmatpush1.bf16.msra.mxu0 %v1634
        %2072 = vmatprep.subr.bf16.mxu0 0
        %2073 = vmatpush1.bf16.msra.mxu0 %v1635
        %2074 = vmatprep.subr.bf16.mxu0 0
        %2075 = vmatpush1.bf16.msra.mxu0 %v1636
        %2076 = vmatprep.subr.bf16.mxu0 0
        %2077 = vmatpush1.bf16.msra.mxu0 %v1637
        %2078 = vmatprep.subr.bf16.mxu0 0
        %2079 = vmatpush1.bf16.msra.mxu0 %v1638
        %2080 = vmatprep.subr.bf16.mxu0 0
        %2081 = vmatpush1.bf16.msra.mxu0 %v1639
        %2082 = vmatprep.subr.bf16.mxu0 0
        %2083 = vmatpush1.bf16.msra.mxu0 %v1640
        %2084 = vmatprep.subr.bf16.mxu0 0
        %2085 = vmatpush1.bf16.msra.mxu0 %v1641
        %2086 = vmatprep.subr.bf16.mxu0 0
        %2087 = vmatpush1.bf16.msra.mxu0 0
        %2088 = vmatprep.subr.bf16.mxu0 0
        %2089 = vmatpush1.bf16.msra.mxu0 0
        %2090 = vmatprep.subr.bf16.mxu0 0
        %2091 = vmatpush1.bf16.msra.mxu0 0
        %2092 = vmatprep.subr.bf16.mxu0 0
        %2093 = vmatpush1.bf16.msra.mxu0 0
        %2094 = vmatprep.subr.bf16.mxu0 0
        %2095 = vmatpush1.bf16.msra.mxu0 0
        %2096 = vmatprep.subr.bf16.mxu0 0
        %2097 = vmatpush1.bf16.msra.mxu0 0
        %2098 = vmatprep.subr.bf16.mxu0 0
        %2099 = vmatpush1.bf16.msra.mxu0 0
        %2100 = vmatprep.subr.bf16.mxu0 0
        %2101 = vmatpush1.bf16.msra.mxu0 0
        %2102 = vmatprep.mubr.bf16.mxu0 0
        %2103 = vmatmul.mubr.bf16.gmra.mrb[0].mxu0 %v1067
        %v2104 = vpop.f32.mrb[0].mxu0
        %v2105 = vadd.f32 %v2016, %v2104
        %v2106 = vpop.f32.mrb[0].mxu0
        %v2107 = vpop.f32.mrb[0].mxu0
        %v2108 = vpop.f32.mrb[0].mxu0
        %2109 = vmatprep.mubr.bf16.mxu0 0
        %2110 = vmatmul.mubr.bf16.gmra.mrb[0].mxu0 %v1076
        %v2111 = vpop.f32.mrb[0].mxu0
        %v2112 = vadd.f32 %v2023, %v2111
        %v2113 = vpop.f32.mrb[0].mxu0
        %v2114 = vpop.f32.mrb[0].mxu0
        %v2115 = vpop.f32.mrb[0].mxu0
        %2116 = vmatprep.mubr.bf16.mxu0 0
        %2117 = vmatmul.mubr.bf16.gmra.mrb[0].mxu0 %v1085
        %v2118 = vpop.f32.mrb[0].mxu0
        %v2119 = vadd.f32 %v2030, %v2118
        %v2120 = vpop.f32.mrb[0].mxu0
        %v2121 = vpop.f32.mrb[0].mxu0
        %v2122 = vpop.f32.mrb[0].mxu0
        %2123 = vmatprep.mubr.bf16.mxu0 0
        %2124 = vmatmul.mubr.bf16.gmra.mrb[0].mxu0 %v1094
        %v2125 = vpop.f32.mrb[0].mxu0
        %v2126 = vadd.f32 %v2037, %v2125
        %v2127 = vpop.f32.mrb[0].mxu0
        %v2128 = vpop.f32.mrb[0].mxu0
        %v2129 = vpop.f32.mrb[0].mxu0
        %2130 = vmatprep.mubr.bf16.mxu0 0
        %2131 = vmatmul.mubr.bf16.gmra.mrb[0].mxu0 %v1103
        %v2132 = vpop.f32.mrb[0].mxu0
        %v2133 = vadd.f32 %v2044, %v2132
        %v2134 = vpop.f32.mrb[0].mxu0
        %v2135 = vpop.f32.mrb[0].mxu0
        %v2136 = vpop.f32.mrb[0].mxu0
        %2137 = vmatprep.mubr.bf16.mxu0 0
        %2138 = vmatmul.mubr.bf16.gmra.mrb[0].mxu0 %v1112
        %v2139 = vpop.f32.mrb[0].mxu0
        %v2140 = vadd.f32 %v2051, %v2139
        %v2141 = vpop.f32.mrb[0].mxu0
        %v2142 = vpop.f32.mrb[0].mxu0
        %v2143 = vpop.f32.mrb[0].mxu0
        %2144 = vmatprep.mubr.bf16.mxu0 0
        %2145 = vmatmul.mubr.bf16.gmra.mrb[0].mxu0 %v1121
        %v2146 = vpop.f32.mrb[0].mxu0
        %v2147 = vadd.f32 %v2058, %v2146
        %v2148 = vpop.f32.mrb[0].mxu0
        %v2149 = vpop.f32.mrb[0].mxu0
        %v2150 = vpop.f32.mrb[0].mxu0
        %2151 = vmatprep.mubr.bf16.mxu0 0
        %2152 = vmatmul.mubr.bf16.gmra.mrb[0].mxu0 %v1130
        %v2153 = vpop.f32.mrb[0].mxu0
        %v2154 = vadd.f32 %v2065, %v2153
        %v2155 = vpop.f32.mrb[0].mxu0
        %v2156 = vpop.f32.mrb[0].mxu0
        %v2157 = vpop.f32.mrb[0].mxu0
        %2158 = vdwg.mxu0
        %v2159 = vmax.f32 %v2105, 0.0
        %v2160 = vmax.f32 %v2112, 0.0
        %v2161 = vmax.f32 %v2119, 0.0
        %v2162 = vmax.f32 %v2126, 0.0
        %v2163 = vmax.f32 %v2133, 0.0
        %v2164 = vmax.f32 %v2140, 0.0
        %v2165 = vmax.f32 %v2147, 0.0
        %v2166 = vmax.f32 %v2154, 0.0
        %v2167 = vpack.c.bf16 %v2159, %v2159
        %vm2168 = vcmask 60416
        %2169 = vst.msk [vmem:[#allocation4] sm:$0xf] %vm2168, %v2167
        %v2170 = vpack.c.bf16 %v2160, %v2160
        %v2172 = vrot.slane %v2170, 4
        %vm2174 = vcmask 64516
        %2175 = vst.msk [vmem:[#allocation4] sm:$0xf0] %vm2174, %v2172
        %v2176 = vpack.c.bf16 %v2161, %v2161
        %2177 = vst.msk [vmem:[#allocation4 + $0x8] sm:$0xf] %vm2168, %v2176
        %v2178 = vpack.c.bf16 %v2162, %v2162
        %v2180 = vrot.slane %v2178, 4
        %2182 = vst.msk [vmem:[#allocation4 + $0x8] sm:$0xf0] %vm2174, %v2180
        %v2183 = vpack.c.bf16 %v2163, %v2163
        %2184 = vst.msk [vmem:[#allocation4 + $0x10] sm:$0xf] %vm2168, %v2183
        %v2185 = vpack.c.bf16 %v2164, %v2164
        %v2187 = vrot.slane %v2185, 4
        %2189 = vst.msk [vmem:[#allocation4 + $0x10] sm:$0xf0] %vm2174, %v2187
        %v2190 = vpack.c.bf16 %v2165, %v2165
        %2191 = vst.msk [vmem:[#allocation4 + $0x18] sm:$0xf] %vm2168, %v2190
        %v2192 = vpack.c.bf16 %v2166, %v2166
        %v2194 = vrot.slane %v2192, 4
        %2196 = vst.msk [vmem:[#allocation4 + $0x18] sm:$0xf0] %vm2174, %v2194
        %v2197 = vld [vmem:[#allocation4] sm:$0xff]
        %v2198 = vld [vmem:[#allocation4 + $0x8] sm:$0xff]
        %v2199 = vld [vmem:[#allocation4 + $0x10] sm:$0xff]
        %v2200 = vld [vmem:[#allocation4 + $0x18] sm:$0xff]
        %v2201 = vld [vmem:[%s5] sm:$0xf]
        %v2202 = vld [vmem:[%s6] sm:$0x1]
        %v2204 = vlaneseq
        %v2205 = vshrl.u32 %v2204, 7
        %v2206 = vsub.s32 0, %v2205
        %v2207 = vrot.slane %v2202, %v2206
        %vm2209 = vcmask 64512
        %v2211 = vsel %vm2209, %v2197, 0
        %v2214 = vsel %vm2209, %v2198, 0
        %v2217 = vsel %vm2209, %v2199, 0
        %v2220 = vsel %vm2209, %v2200, 0
        %vm2222 = vcmask 1043456
        %v2224 = vsel %vm2222, %v2201, 0
        %2226 = vmatprep.subr.bf16.mxu0 0
        %2227 = vmatpush1.bf16.msra.mxu0 %v2224
        %2228 = vmatprep.subr.bf16.mxu0 0
        %2229 = vmatpush1.bf16.msra.mxu0 0
        %2230 = vmatprep.subr.bf16.mxu0 0
        %2231 = vmatpush1.bf16.msra.mxu0 0
        %2232 = vmatprep.subr.bf16.mxu0 0
        %2233 = vmatpush1.bf16.msra.mxu0 0
        %2234 = vmatprep.subr.bf16.mxu0 0
        %2235 = vmatpush1.bf16.msra.mxu0 0
        %2236 = vmatprep.subr.bf16.mxu0 0
        %2237 = vmatpush1.bf16.msra.mxu0 0
        %2238 = vmatprep.subr.bf16.mxu0 0
        %2239 = vmatpush1.bf16.msra.mxu0 0
        %2240 = vmatprep.subr.bf16.mxu0 0
        %2241 = vmatpush1.bf16.msra.mxu0 0
        %2242 = vmatprep.subr.bf16.mxu0 0
        %2243 = vmatpush1.bf16.msra.mxu0 0
        %2244 = vmatprep.subr.bf16.mxu0 0
        %2245 = vmatpush1.bf16.msra.mxu0 0
        %2246 = vmatprep.subr.bf16.mxu0 0
        %2247 = vmatpush1.bf16.msra.mxu0 0
        %2248 = vmatprep.subr.bf16.mxu0 0
        %2249 = vmatpush1.bf16.msra.mxu0 0
        %2250 = vmatprep.subr.bf16.mxu0 0
        %2251 = vmatpush1.bf16.msra.mxu0 0
        %2252 = vmatprep.subr.bf16.mxu0 0
        %2253 = vmatpush1.bf16.msra.mxu0 0
        %2254 = vmatprep.subr.bf16.mxu0 0
        %2255 = vmatpush1.bf16.msra.mxu0 0
        %2256 = vmatprep.subr.bf16.mxu0 0
        %2257 = vmatpush1.bf16.msra.mxu0 0
        %2258 = vmatprep.mubr.bf16.mxu0 0
        %2259 = vmatmul.mubr.bf16.gmra.mrb[0].mxu0 %v2211
        %v2260 = vpop.f32.mrb[0].mxu0
        %v2261 = vadd.f32 %v2207, %v2260
        %v2262 = vpop.f32.mrb[0].mxu0
        %v2263 = vpop.f32.mrb[0].mxu0
        %v2264 = vadd.f32 %v2207, %v2263
        %v2265 = vpop.f32.mrb[0].mxu0
        %2266 = vmatprep.mubr.bf16.mxu0 0
        %2267 = vmatmul.mubr.bf16.gmra.mrb[0].mxu0 %v2214
        %v2268 = vpop.f32.mrb[0].mxu0
        %v2269 = vadd.f32 %v2207, %v2268
        %v2270 = vpop.f32.mrb[0].mxu0
        %v2271 = vpop.f32.mrb[0].mxu0
        %v2272 = vadd.f32 %v2207, %v2271
        %v2273 = vpop.f32.mrb[0].mxu0
        %2274 = vmatprep.mubr.bf16.mxu0 0
        %2275 = vmatmul.mubr.bf16.gmra.mrb[0].mxu0 %v2217
        %v2276 = vpop.f32.mrb[0].mxu0
        %v2277 = vadd.f32 %v2207, %v2276
        %v2278 = vpop.f32.mrb[0].mxu0
        %v2279 = vpop.f32.mrb[0].mxu0
        %v2280 = vadd.f32 %v2207, %v2279
        %v2281 = vpop.f32.mrb[0].mxu0
        %2282 = vmatprep.mubr.bf16.mxu0 0
        %2283 = vmatmul.mubr.bf16.gmra.mrb[0].mxu0 %v2220
        %v2284 = vpop.f32.mrb[0].mxu0
        %v2285 = vadd.f32 %v2207, %v2284
        %v2286 = vpop.f32.mrb[0].mxu0
        %v2287 = vpop.f32.mrb[0].mxu0
        %v2288 = vadd.f32 %v2207, %v2287
        %v2289 = vpop.f32.mrb[0].mxu0
        %2290 = vdwg.mxu0
        %v2291 = vunpack.c.l.bf16 %v290
        %v2292 = vunpack.c.l.bf16 %v291
        %v2293 = vunpack.c.l.bf16 %v292
        %v2294 = vunpack.c.l.bf16 %v293
        %v2295 = vunpack.c.l.bf16 %v294
        %v2296 = vunpack.c.l.bf16 %v295
        %v2297 = vunpack.c.l.bf16 %v296
        %v2298 = vunpack.c.l.bf16 %v297
        %v2299 = vadd.f32 %v2261, %v2291
        %v2300 = vadd.f32 %v2264, %v2292
        %v2301 = vadd.f32 %v2269, %v2293
        %v2302 = vadd.f32 %v2272, %v2294
        %v2303 = vadd.f32 %v2277, %v2295
        %v2304 = vadd.f32 %v2280, %v2296
        %v2305 = vadd.f32 %v2285, %v2297
        %v2306 = vadd.f32 %v2288, %v2298
        %v2307 = vmax.f32 %v2299, 0.0
        %v2308 = vmax.f32 %v2300, 0.0
        %v2309 = vmax.f32 %v2301, 0.0
        %v2310 = vmax.f32 %v2302, 0.0
        %v2311 = vmax.f32 %v2303, 0.0
        %v2312 = vmax.f32 %v2304, 0.0
        %v2313 = vmax.f32 %v2305, 0.0
        %v2314 = vmax.f32 %v2306, 0.0
        %v2315 = vpack.c.bf16 %v2308, %v2307
        %v2316 = vpack.c.bf16 %v2310, %v2309
        %v2317 = vpack.c.bf16 %v2312, %v2311
        %v2318 = vpack.c.bf16 %v2314, %v2313
        %v2323 = vunpack.c.l.b16 %v2315
        %v2324 = vunpack.c.h.b16 %v2315
        %v2325 = vunpack.c.l.b16 %v2316
        %v2326 = vunpack.c.h.b16 %v2316
        %v2327 = vunpack.c.l.b16 %v2317
        %v2328 = vunpack.c.h.b16 %v2317
        %v2329 = vunpack.c.l.b16 %v2318
        %v2330 = vunpack.c.h.b16 %v2318
        %v2331 = vpack.c.b16 %v2323, %v2323
        %v2332 = vpack.c.b16 %v2324, %v2324
        %v2333 = vpack.c.b16 %v2325, %v2325
        %v2334 = vpack.c.b16 %v2326, %v2326
        %v2335 = vpack.c.b16 %v2327, %v2327
        %v2336 = vpack.c.b16 %v2328, %v2328
        %v2337 = vpack.c.b16 %v2329, %v2329
        %v2338 = vpack.c.b16 %v2330, %v2330
        %vm2347 = vcmask 257024
        %2348 = vst.msk [vmem:[%s271] sm:$0xf] %vm2347, %v2331
        %2349 = vst.msk [vmem:[%s271 + $0x4] sm:$0xf] %vm2347, %v2332
        %2350 = vst.msk [vmem:[%s271 + $0x8] sm:$0xf] %vm2347, %v2333
        %2351 = vst.msk [vmem:[%s271 + $0xc] sm:$0xf] %vm2347, %v2334
        %2352 = vst.msk [vmem:[%s271 + $0x10] sm:$0xf] %vm2347, %v2335
        %2353 = vst.msk [vmem:[%s271 + $0x14] sm:$0xf] %vm2347, %v2336
        %2354 = vst.msk [vmem:[%s271 + $0x18] sm:$0xf] %vm2347, %v2337
        %2355 = vst.msk [vmem:[%s271 + $0x1c] sm:$0xf] %vm2347, %v2338
        %s2356 = sand.u32 %s181, 1
        %s2357 = scalar_lea.sflag [#allocation6], %s2356
        %s2358 = sand.u32 %s181, 1
        %s2359 = smul.addr %s2358, 32
        %s2360 = scalar_lea.vmem [#allocation5], %s2359
        // Predicated region
        $region49: #{bottleneck_forward.1} parent=47 // pred_check
          %p2361 = pneg %p191
        $region50: #{bottleneck_forward.1} parent=47 // pred_check_branch
          %2363 = sbr.rel (%p2361) target = $region52
        $region51: #{bottleneck_forward.1} parent=47 // pred_region
          %s2365 = ssub.s32 512, 512
          %2366 = vsyncadd %s2357, %s2365
          %s2367 = smul.addr %s21, 8
          %s2368 = smul.addr %s2367, 64
          %s2369 = scalar_lea.hbm %s7, %s2368
          %s2370 = sshll.u32 %s2360, 4
          %s2371 = int_to_ptr.vmem [resolvable:$true] %s2370
          %2376 = dma.vmem_to_hbm [thread:$0]  %s2371, 512, %s2369, %s2357, 64, 64, 4
        $region52: #{bottleneck_forward.1} parent=47 // pred_fallthru
          _
      $region48: #{bottleneck_forward.1} parent=5 // pred_fallthru
        _
      %p2377 = scmp.le.s32.totalorder 2, %s16
      // Predicated region
      $region53: #{bottleneck_forward.1} parent=5 // pred_check
        %p2378 = pneg %p2377
      $region54: #{bottleneck_forward.1} parent=5 // pred_check_branch
        %2380 = sbr.rel (%p2378) target = $region56
      $region55: #{bottleneck_forward.1} parent=5 // pred_region
        %s2381 = ssub.s32 %s16, 2
        // Predicated region
        $region57: #{bottleneck_forward.1} parent=55 // pred_check
          %p2382 = pneg %p197
        $region58: #{bottleneck_forward.1} parent=55 // pred_check_branch
          %2384 = sbr.rel (%p2382) target = $region60
        $region59: #{bottleneck_forward.1} parent=55 // pred_region
          %s2385 = sand.u32 %s182, 1
          %s2386 = scalar_lea.sflag [#allocation6], %s2385
          %s2387 = sand.u32 %s182, 1
          %s2388 = smul.addr %s2387, 32
          %s2389 = scalar_lea.vmem [#allocation5], %s2388
          %2390 = dma.done %s2386, 512
        $region60: #{bottleneck_forward.1} parent=55 // pred_fallthru
          _
      $region56: #{bottleneck_forward.1} parent=5 // pred_fallthru
        _
    $region6: #{bottleneck_forward.1} parent=1 // loop_footer
      %s20 = sadd.s32 1, %s16
    $region7: #{bottleneck_forward.1} parent=1 // loop_footer_branch
      %15 = sbr.rel target = $region3
    $region8: #{bottleneck_forward.1} parent=1 // loop_exit
      _
    %2391 = vsyncpa [#allocation6], 1
    %s2392 = scalar_lea.sflag [#allocation6], 1
    %2393 = vsyncpa %s2392, 1

</llo_original>
